<compile_context>
chip_gen: v7x
topology: tpu7x:2x2x1
jax: 0.10.0
libtpu: 0.0.40
codegen_flags: <defaults>
</compile_context>

<pallas_src>
import functools
import math

import jax
import jax.numpy as jnp
from jax.experimental import pallas as pl
from jax.experimental.pallas import tpu as pltpu


def _gelu_tanh(x):
    # PyTorch "gelu_pytorch_tanh" (SigLIP's hidden_act), kept in f32.
    c = jnp.asarray(0.7978845608028654, x.dtype)  # sqrt(2/pi)
    return 0.5 * x * (1.0 + jnp.tanh(c * (x + 0.044715 * x * x * x)))


def _layernorm(x, gamma, beta, eps):
    mean = jnp.mean(x, axis=-1, keepdims=True)
    var = jnp.mean(jnp.square(x - mean), axis=-1, keepdims=True)
    return (x - mean) * jax.lax.rsqrt(var + eps) * gamma + beta


def _wspec():
    # Whole array resident in VMEM: single copy, no pipelining / double
    # buffering of weights.
    return pl.BlockSpec(memory_space=pltpu.MemorySpace.VMEM)


def _scoped_vmem_limit(working_set_bytes):
    # Size the scoped VMEM limit from the actual working set (+ headroom),
    # clamped so it stays sane on v7x (64 MiB physical) as well as v5e/v6e
    # (128 MiB physical).
    return int(min(max(working_set_bytes + (8 << 20), 32 << 20), 96 << 20))


# --------------------------- kernel 1: LN1 + QKV ----------------------------

def _ln_qkv_kernel(x_ref, ln1_g_ref, ln1_b_ref,
                   wq_ref, wk_ref, wv_ref, bq_ref, bk_ref, bv_ref,
                   q_ref, k_ref, v_ref, *, eps, scale):
    x = x_ref[0].astype(jnp.float32)                    # (TQ, D)
    h = _layernorm(x, ln1_g_ref[0], ln1_b_ref[0], eps)
    hb = h.astype(jnp.bfloat16)
    # Three separate projections: only one (TQ, D) f32 result live at a time.
    q = jnp.dot(hb, wq_ref[...], preferred_element_type=jnp.float32) + bq_ref[0]
    q_ref[0] = (q * scale).astype(q_ref.dtype)          # fold softmax scale into Q
    k = jnp.dot(hb, wk_ref[...], preferred_element_type=jnp.float32) + bk_ref[0]
    k_ref[0] = k.astype(k_ref.dtype)
    v = jnp.dot(hb, wv_ref[...], preferred_element_type=jnp.float32) + bv_ref[0]
    v_ref[0] = v.astype(v_ref.dtype)


# --------------- kernel 2: attention + out-proj + residual ------------------

def _attn_kernel(x_ref, q_ref, k_ref, v_ref, wo_ref, bo_ref, o_ref,
                 *, num_heads, head_dim):
    x = x_ref[0].astype(jnp.float32)                    # (TQ, D) residual
    acc = x + bo_ref[0]                                  # residual + out-proj bias
    for h in range(num_heads):                           # static unroll over heads
        hs, he = h * head_dim, (h + 1) * head_dim
        q_h = q_ref[0, :, hs:he]                         # (TQ, hd) bf16, scale folded in
        k_h = k_ref[0, :, hs:he]                         # (S,  hd) bf16
        v_h = v_ref[0, :, hs:he]                         # (S,  hd) bf16
        s = jax.lax.dot_general(q_h, k_h, (((1,), (1,)), ((), ())),
                                preferred_element_type=jnp.float32)   # (TQ, S)
        m = jnp.max(s, axis=-1, keepdims=True)
        p = jnp.exp(s - m)
        l = jnp.sum(p, axis=-1, keepdims=True)
        o_h = jnp.dot(p.astype(jnp.bfloat16), v_h,
                      preferred_element_type=jnp.float32) / l          # exact f32 divide
        # Per-head out-projection: sublane-aligned (hd, D) row slab of Wo.
        acc = acc + jnp.dot(o_h.astype(jnp.bfloat16), wo_ref[hs:he, :],
                            preferred_element_type=jnp.float32)
    o_ref[0] = acc.astype(o_ref.dtype)


# --------------------- kernel 3: LN2 + MLP + residual -----------------------

def _mlp_kernel(h1_ref, ln2_g_ref, ln2_b_ref,
                w1_ref, b1_ref, w2_ref, b2_ref, o_ref, *, eps):
    h1 = h1_ref[0].astype(jnp.float32)                   # (TQ, D) residual
    h2 = _layernorm(h1, ln2_g_ref[0], ln2_b_ref[0], eps)
    f1 = jnp.dot(h2.astype(jnp.bfloat16), w1_ref[...],
                 preferred_element_type=jnp.float32) + b1_ref[0]
    f1 = _gelu_tanh(f1)
    f2 = jnp.dot(f1.astype(jnp.bfloat16), w2_ref[...],
                 preferred_element_type=jnp.float32) + b2_ref[0]
    o_ref[0] = (h1 + f2).astype(o_ref.dtype)


# --------------------------------- wrapper ----------------------------------

def siglip_encoder_layer(x, params, *, num_heads, eps=1e-6, tq=256):
    """SiglipEncoderLayer forward (attention + MLP with pre-LayerNorms)."""
    B, S, D = x.shape
    tq = min(tq, S)
    assert D % num_heads == 0, "hidden_size must be divisible by num_heads"
    assert S % tq == 0, "sequence length must be divisible by the query tile"
    head_dim = D // num_heads
    scale = head_dim ** -0.5
    nq = S // tq

    (ln1_g, ln1_b, wqkv, bqkv, wo, bo, ln2_g, ln2_b, w1, b1, w2, b2) = params
    I = w1.shape[-1]

    # Split the packed QKV projection (columns ordered [Wq | Wk | Wv], matching
    # torch's qkv.chunk(3, dim=-1)).  MXU weights go in as bf16 (f32 accum),
    # biases / LN params stay f32.
    bf16 = jnp.bfloat16
    wq, wk, wv = (w.astype(bf16) for w in jnp.split(wqkv, 3, axis=-1))
    bq, bk, bv = jnp.split(bqkv, 3, axis=-1)
    wo_bf, w1_bf, w2_bf = wo.astype(bf16), w1.astype(bf16), w2.astype(bf16)

    act_spec = pl.BlockSpec((1, tq, D), lambda b, t: (b, t, 0))
    kv_spec = pl.BlockSpec((1, S, D), lambda b, t: (b, 0, 0))   # full K/V per batch elem

    # Per-kernel working-set estimates (bytes) for the scoped VMEM limit.
    qkv_ws = (3 * D * D * 2 + 8 * D * 4
              + 2 * tq * D * 4 + 3 * 2 * tq * D * 2 + 4 * tq * D * 4)
    attn_ws = (D * D * 2 + 2 * D * 4
               + 2 * tq * D * 4 + 2 * tq * D * 2 + 2 * 2 * S * D * 2
               + 2 * tq * D * 4 + tq * S * 4 + 2 * tq * D * 4)
    mlp_ws = (2 * D * I * 2 + (2 * D + I) * 4
              + 4 * tq * D * 4 + 2 * tq * I * 4)

    cparams = lambda ws: pltpu.CompilerParams(
        dimension_semantics=("parallel", "parallel"),
        vmem_limit_bytes=_scoped_vmem_limit(ws))

    # ---- kernel 1: LN1 + QKV projection ----
    q, k, v = pl.pallas_call(
        functools.partial(_ln_qkv_kernel, eps=eps, scale=scale),
        out_shape=tuple(jax.ShapeDtypeStruct((B, S, D), bf16) for _ in range(3)),
        grid=(B, nq),
        in_specs=[act_spec,
                  _wspec(), _wspec(),                       # ln1 gamma/beta
                  _wspec(), _wspec(), _wspec(),             # Wq, Wk, Wv
                  _wspec(), _wspec(), _wspec()],            # bq, bk, bv
        out_specs=(pl.BlockSpec((1, tq, D), lambda b, t: (b, t, 0)),
                   pl.BlockSpec((1, tq, D), lambda b, t: (b, t, 0)),
                   pl.BlockSpec((1, tq, D), lambda b, t: (b, t, 0))),
        compiler_params=cparams(qkv_ws),
    )(x, ln1_g, ln1_b, wq, wk, wv, bq, bk, bv)

    # ---- kernel 2: attention + out-proj + residual ----
    h1 = pl.pallas_call(
        functools.partial(_attn_kernel, num_heads=num_heads, head_dim=head_dim),
        out_shape=jax.ShapeDtypeStruct((B, S, D), x.dtype),
        grid=(B, nq),
        in_specs=[act_spec,                                  # x (residual)
                  pl.BlockSpec((1, tq, D), lambda b, t: (b, t, 0)),   # q
                  kv_spec, kv_spec,                          # k, v (whole sequence)
                  _wspec(), _wspec()],                       # Wo, bo
        out_specs=pl.BlockSpec((1, tq, D), lambda b, t: (b, t, 0)),
        compiler_params=cparams(attn_ws),
    )(x, q, k, v, wo_bf, bo)

    # ---- kernel 3: LN2 + MLP + residual ----
    out = pl.pallas_call(
        functools.partial(_mlp_kernel, eps=eps),
        out_shape=jax.ShapeDtypeStruct((B, S, D), x.dtype),
        grid=(B, nq),
        in_specs=[act_spec,
                  _wspec(), _wspec(),                        # ln2 gamma/beta
                  _wspec(), _wspec(), _wspec(), _wspec()],   # W1, b1, W2, b2
        out_specs=pl.BlockSpec((1, tq, D), lambda b, t: (b, t, 0)),
        compiler_params=cparams(mlp_ws),
    )(h1, ln2_g, ln2_b, w1_bf, b1, w2_bf, b2)

    return out


# ------------------------------- reference ----------------------------------

def _reference(x, params, *, num_heads, eps=1e-6):
    """Pure-JAX f32 reference mirroring the PyTorch module semantics."""
    (ln1_g, ln1_b, wqkv, bqkv, wo, bo, ln2_g, ln2_b, w1, b1, w2, b2) = params
    B, S, D = x.shape
    hd = D // num_heads
    scale = hd ** -0.5

    def ln(h, g, b):
        m = h.mean(-1, keepdims=True)
        v = ((h - m) ** 2).mean(-1, keepdims=True)
        return (h - m) / jnp.sqrt(v + eps) * g[0] + b[0]

    residual = x
    h = ln(x, ln1_g, ln1_b)
    qkv = h @ wqkv + bqkv[0]
    q, k, v = jnp.split(qkv, 3, axis=-1)
    q = q.reshape(B, S, num_heads, hd)
    k = k.reshape(B, S, num_heads, hd)
    v = v.reshape(B, S, num_heads, hd)
    s = jnp.einsum("bqhd,bkhd->bhqk", q, k) * scale
    p = jax.nn.softmax(s, axis=-1)
    a = jnp.einsum("bhqk,bkhd->bqhd", p, v).reshape(B, S, D)
    h = a @ wo + bo[0]
    h = residual + h
    residual = h
    h2 = ln(h, ln2_g, ln2_b)
    f = _gelu_tanh(h2 @ w1 + b1[0])
    f = f @ w2 + b2[0]
    return residual + f


if __name__ == "__main__":
    # Small SigLIP-like config; D multiple of 128 and S a multiple of the
    # (clamped) query tile so all blocks are lane/sublane aligned.
    B, S, D = 2, 64, 256
    num_heads = 4              # head_dim = 64
    intermediate = 512
    eps = 1e-6

    key = jax.random.PRNGKey(0)
    keys = jax.random.split(key, 10)

    x = jax.random.normal(keys[0], (B, S, D), dtype=jnp.float32)
    init = lambda k, shape, s=0.02: (s * jax.random.normal(k, shape)).astype(jnp.float32)

    ln1_g = jnp.ones((1, D), jnp.float32)
    ln1_b = jnp.zeros((1, D), jnp.float32)
    wqkv = init(keys[1], (D, 3 * D))
    bqkv = init(keys[2], (1, 3 * D))
    wo = init(keys[3], (D, D))
    bo = init(keys[4], (1, D))
    ln2_g = jnp.ones((1, D), jnp.float32)
    ln2_b = jnp.zeros((1, D), jnp.float32)
    w1 = init(keys[5], (D, intermediate))
    b1 = init(keys[6], (1, intermediate))
    w2 = init(keys[7], (intermediate, D))
    b2 = init(keys[8], (1, D))

    params = (ln1_g, ln1_b, wqkv, bqkv, wo, bo, ln2_g, ln2_b, w1, b1, w2, b2)

    out = siglip_encoder_layer(x, params, num_heads=num_heads, eps=eps)
    out = jax.block_until_ready(out)

    ref = _reference(x, params, num_heads=num_heads, eps=eps)
    err = jnp.max(jnp.abs(out - ref))
    assert out.shape == (B, S, D)
    # bf16 MXU inputs (f32 accumulation) -> small, bounded mismatch vs f32 ref.
    assert jnp.allclose(out, ref, atol=2e-2, rtol=2e-2), f"max abs err {err}"

    print("KERNEL_OK")
</pallas_src>

<mosaic_0001>
module attributes {stable_mosaic.version = 11 : i64} {
  func.func @_ln_qkv_kernel(%arg0: i32, %arg1: i32, %arg2: memref<1x64x256xf32, #tpu.memory_space<vmem>>, %arg3: memref<1x256xf32, #tpu.memory_space<vmem>>, %arg4: memref<1x256xf32, #tpu.memory_space<vmem>>, %arg5: memref<256x256xbf16, #tpu.memory_space<vmem>>, %arg6: memref<256x256xbf16, #tpu.memory_space<vmem>>, %arg7: memref<256x256xbf16, #tpu.memory_space<vmem>>, %arg8: memref<1x256xf32, #tpu.memory_space<vmem>>, %arg9: memref<1x256xf32, #tpu.memory_space<vmem>>, %arg10: memref<1x256xf32, #tpu.memory_space<vmem>>, %arg11: memref<1x64x256xbf16, #tpu.memory_space<vmem>>, %arg12: memref<1x64x256xbf16, #tpu.memory_space<vmem>>, %arg13: memref<1x64x256xbf16, #tpu.memory_space<vmem>>) attributes {dimension_semantics = [#tpu.dimension_semantics<parallel>, #tpu.dimension_semantics<parallel>], iteration_bounds = array<i64: 2, 1>, scalar_prefetch = 0 : i64, scratch_operands = 0 : i64, tpu.core_type = #tpu.core_type<tc>, window_params = [{transform_indices = @transform_0, window_bounds = array<i64: 1, 64, 256>}, {pipeline_mode = #tpu.pipeline_mode<synchronous>, transform_indices = @transform_1, window_bounds = array<i64: 1, 256>}, {pipeline_mode = #tpu.pipeline_mode<synchronous>, transform_indices = @transform_2, window_bounds = array<i64: 1, 256>}, {pipeline_mode = #tpu.pipeline_mode<synchronous>, transform_indices = @transform_3, window_bounds = array<i64: 256, 256>}, {pipeline_mode = #tpu.pipeline_mode<synchronous>, transform_indices = @transform_4, window_bounds = array<i64: 256, 256>}, {pipeline_mode = #tpu.pipeline_mode<synchronous>, transform_indices = @transform_5, window_bounds = array<i64: 256, 256>}, {pipeline_mode = #tpu.pipeline_mode<synchronous>, transform_indices = @transform_6, window_bounds = array<i64: 1, 256>}, {pipeline_mode = #tpu.pipeline_mode<synchronous>, transform_indices = @transform_7, window_bounds = array<i64: 1, 256>}, {pipeline_mode = #tpu.pipeline_mode<synchronous>, transform_indices = @transform_8, window_bounds = array<i64: 1, 256>}, {transform_indices = @transform_9, window_bounds = array<i64: 1, 64, 256>}, {transform_indices = @transform_10, window_bounds = array<i64: 1, 64, 256>}, {transform_indices = @transform_11, window_bounds = array<i64: 1, 64, 256>}]} {
    %c0 = arith.constant 0 : index
    %c0_0 = arith.constant 0 : index
    %c0_1 = arith.constant 0 : index
    %0 = vector.load %arg2[%c0, %c0_0, %c0_1] : memref<1x64x256xf32, #tpu.memory_space<vmem>>, vector<1x64x256xf32>
    %1 = vector.shape_cast %0 : vector<1x64x256xf32> to vector<64x256xf32>
    %c0_2 = arith.constant 0 : index
    %c0_3 = arith.constant 0 : index
    %2 = vector.load %arg3[%c0_2, %c0_3] : memref<1x256xf32, #tpu.memory_space<vmem>>, vector<1x256xf32>
    %3 = vector.shape_cast %2 : vector<1x256xf32> to vector<256xf32>
    %c0_4 = arith.constant 0 : index
    %c0_5 = arith.constant 0 : index
    %4 = vector.load %arg4[%c0_4, %c0_5] : memref<1x256xf32, #tpu.memory_space<vmem>>, vector<1x256xf32>
    %5 = vector.shape_cast %4 : vector<1x256xf32> to vector<256xf32>
    %cst = arith.constant dense<0.000000e+00> : vector<64xf32>
    %6 = vector.multi_reduction <add>, %1, %cst [1] : vector<64x256xf32> to vector<64xf32>
    %7 = vector.shape_cast %6 : vector<64xf32> to vector<64x1xf32>
    %cst_6 = arith.constant 2.560000e+02 : f32
    %8 = vector.broadcast %cst_6 : f32 to vector<64x1xf32>
    %9 = arith.divf %7, %8 : vector<64x1xf32>
    %10 = vector.broadcast %9 : vector<64x1xf32> to vector<64x256xf32>
    %11 = arith.subf %1, %10 : vector<64x256xf32>
    %12 = arith.mulf %11, %11 : vector<64x256xf32>
    %cst_7 = arith.constant dense<0.000000e+00> : vector<64xf32>
    %13 = vector.multi_reduction <add>, %12, %cst_7 [1] : vector<64x256xf32> to vector<64xf32>
    %14 = vector.shape_cast %13 : vector<64xf32> to vector<64x1xf32>
    %cst_8 = arith.constant 2.560000e+02 : f32
    %15 = vector.broadcast %cst_8 : f32 to vector<64x1xf32>
    %16 = arith.divf %14, %15 : vector<64x1xf32>
    %17 = vector.broadcast %9 : vector<64x1xf32> to vector<64x256xf32>
    %18 = arith.subf %1, %17 : vector<64x256xf32>
    %cst_9 = arith.constant 9.99999997E-7 : f32
    %19 = vector.broadcast %cst_9 : f32 to vector<64x1xf32>
    %20 = arith.addf %16, %19 : vector<64x1xf32>
    %21 = math.rsqrt %20 : vector<64x1xf32>
    %22 = vector.broadcast %21 : vector<64x1xf32> to vector<64x256xf32>
    %23 = arith.mulf %18, %22 : vector<64x256xf32>
    %24 = vector.shape_cast %3 : vector<256xf32> to vector<1x256xf32>
    %25 = vector.broadcast %24 : vector<1x256xf32> to vector<64x256xf32>
    %26 = arith.mulf %23, %25 : vector<64x256xf32>
    %27 = vector.shape_cast %5 : vector<256xf32> to vector<1x256xf32>
    %28 = vector.broadcast %27 : vector<1x256xf32> to vector<64x256xf32>
    %29 = arith.addf %26, %28 : vector<64x256xf32>
    %30 = arith.truncf %29 : vector<64x256xf32> to vector<64x256xbf16>
    %c0_10 = arith.constant 0 : index
    %c0_11 = arith.constant 0 : index
    %31 = vector.load %arg5[%c0_10, %c0_11] : memref<256x256xbf16, #tpu.memory_space<vmem>>, vector<256x256xbf16>
    %cst_12 = arith.constant dense<0.000000e+00> : vector<64x256xf32>
    %32 = tpu.matmul %30, %31, %cst_12 {dimension_numbers = #tpu.dot_dimension_numbers<[1], [0], [0], [1], [0, 0, 1, 1], [], []>} : vector<64x256xbf16>, vector<256x256xbf16>, vector<64x256xf32> -> vector<64x256xf32>
    %c0_13 = arith.constant 0 : index
    %c0_14 = arith.constant 0 : index
    %33 = vector.load %arg8[%c0_13, %c0_14] : memref<1x256xf32, #tpu.memory_space<vmem>>, vector<1x256xf32>
    %34 = vector.shape_cast %33 : vector<1x256xf32> to vector<256xf32>
    %35 = vector.shape_cast %34 : vector<256xf32> to vector<1x256xf32>
    %36 = vector.broadcast %35 : vector<1x256xf32> to vector<64x256xf32>
    %37 = arith.addf %32, %36 : vector<64x256xf32>
    %cst_15 = arith.constant 1.250000e-01 : f32
    %38 = vector.broadcast %cst_15 : f32 to vector<64x256xf32>
    %39 = arith.mulf %37, %38 : vector<64x256xf32>
    %40 = arith.truncf %39 : vector<64x256xf32> to vector<64x256xbf16>
    %c0_16 = arith.constant 0 : index
    %c0_17 = arith.constant 0 : index
    %c0_18 = arith.constant 0 : index
    %41 = vector.load %arg11[%c0_16, %c0_17, %c0_18] : memref<1x64x256xbf16, #tpu.memory_space<vmem>>, vector<1x64x256xbf16>
    %42 = vector.shape_cast %41 : vector<1x64x256xbf16> to vector<64x256xbf16>
    %43 = vector.shape_cast %40 : vector<64x256xbf16> to vector<1x64x256xbf16>
    tpu.vector_store %arg11[%c0_16, %c0_17, %c0_18], %43 {strides = array<i32>} : memref<1x64x256xbf16, #tpu.memory_space<vmem>>, vector<1x64x256xbf16>,
    %c0_19 = arith.constant 0 : index
    %c0_20 = arith.constant 0 : index
    %44 = vector.load %arg6[%c0_19, %c0_20] : memref<256x256xbf16, #tpu.memory_space<vmem>>, vector<256x256xbf16>
    %cst_21 = arith.constant dense<0.000000e+00> : vector<64x256xf32>
    %45 = tpu.matmul %30, %44, %cst_21 {dimension_numbers = #tpu.dot_dimension_numbers<[1], [0], [0], [1], [0, 0, 1, 1], [], []>} : vector<64x256xbf16>, vector<256x256xbf16>, vector<64x256xf32> -> vector<64x256xf32>
    %c0_22 = arith.constant 0 : index
    %c0_23 = arith.constant 0 : index
    %46 = vector.load %arg9[%c0_22, %c0_23] : memref<1x256xf32, #tpu.memory_space<vmem>>, vector<1x256xf32>
    %47 = vector.shape_cast %46 : vector<1x256xf32> to vector<256xf32>
    %48 = vector.shape_cast %47 : vector<256xf32> to vector<1x256xf32>
    %49 = vector.broadcast %48 : vector<1x256xf32> to vector<64x256xf32>
    %50 = arith.addf %45, %49 : vector<64x256xf32>
    %51 = arith.truncf %50 : vector<64x256xf32> to vector<64x256xbf16>
    %c0_24 = arith.constant 0 : index
    %c0_25 = arith.constant 0 : index
    %c0_26 = arith.constant 0 : index
    %52 = vector.load %arg12[%c0_24, %c0_25, %c0_26] : memref<1x64x256xbf16, #tpu.memory_space<vmem>>, vector<1x64x256xbf16>
    %53 = vector.shape_cast %52 : vector<1x64x256xbf16> to vector<64x256xbf16>
    %54 = vector.shape_cast %51 : vector<64x256xbf16> to vector<1x64x256xbf16>
    tpu.vector_store %arg12[%c0_24, %c0_25, %c0_26], %54 {strides = array<i32>} : memref<1x64x256xbf16, #tpu.memory_space<vmem>>, vector<1x64x256xbf16>,
    %c0_27 = arith.constant 0 : index
    %c0_28 = arith.constant 0 : index
    %55 = vector.load %arg7[%c0_27, %c0_28] : memref<256x256xbf16, #tpu.memory_space<vmem>>, vector<256x256xbf16>
    %cst_29 = arith.constant dense<0.000000e+00> : vector<64x256xf32>
    %56 = tpu.matmul %30, %55, %cst_29 {dimension_numbers = #tpu.dot_dimension_numbers<[1], [0], [0], [1], [0, 0, 1, 1], [], []>} : vector<64x256xbf16>, vector<256x256xbf16>, vector<64x256xf32> -> vector<64x256xf32>
    %c0_30 = arith.constant 0 : index
    %c0_31 = arith.constant 0 : index
    %57 = vector.load %arg10[%c0_30, %c0_31] : memref<1x256xf32, #tpu.memory_space<vmem>>, vector<1x256xf32>
    %58 = vector.shape_cast %57 : vector<1x256xf32> to vector<256xf32>
    %59 = vector.shape_cast %58 : vector<256xf32> to vector<1x256xf32>
    %60 = vector.broadcast %59 : vector<1x256xf32> to vector<64x256xf32>
    %61 = arith.addf %56, %60 : vector<64x256xf32>
    %62 = arith.truncf %61 : vector<64x256xf32> to vector<64x256xbf16>
    %c0_32 = arith.constant 0 : index
    %c0_33 = arith.constant 0 : index
    %c0_34 = arith.constant 0 : index
    %63 = vector.load %arg13[%c0_32, %c0_33, %c0_34] : memref<1x64x256xbf16, #tpu.memory_space<vmem>>, vector<1x64x256xbf16>
    %64 = vector.shape_cast %63 : vector<1x64x256xbf16> to vector<64x256xbf16>
    %65 = vector.shape_cast %62 : vector<64x256xbf16> to vector<1x64x256xbf16>
    tpu.vector_store %arg13[%c0_32, %c0_33, %c0_34], %65 {strides = array<i32>} : memref<1x64x256xbf16, #tpu.memory_space<vmem>>, vector<1x64x256xbf16>,
    return
  }
  func.func @transform_0(%arg0: i32, %arg1: i32) -> (i32, i32, i32) {
    %c0_i32 = arith.constant 0 : i32
    %c0_i32_0 = arith.constant 0 : i32
    return %arg0, %arg1, %c0_i32 : i32, i32, i32
  }
  func.func @transform_1(%arg0: i32, %arg1: i32) -> (i32, i32) {
    %c0_i32 = arith.constant 0 : i32
    %c0_i32_0 = arith.constant 0 : i32
    %c0_i32_1 = arith.constant 0 : i32
    return %c0_i32, %c0_i32_0 : i32, i32
  }
  func.func @transform_2(%arg0: i32, %arg1: i32) -> (i32, i32) {
    %c0_i32 = arith.constant 0 : i32
    %c0_i32_0 = arith.constant 0 : i32
    %c0_i32_1 = arith.constant 0 : i32
    return %c0_i32, %c0_i32_0 : i32, i32
  }
  func.func @transform_3(%arg0: i32, %arg1: i32) -> (i32, i32) {
    %c0_i32 = arith.constant 0 : i32
    %c0_i32_0 = arith.constant 0 : i32
    %c0_i32_1 = arith.constant 0 : i32
    return %c0_i32, %c0_i32_0 : i32, i32
  }
  func.func @transform_4(%arg0: i32, %arg1: i32) -> (i32, i32) {
    %c0_i32 = arith.constant 0 : i32
    %c0_i32_0 = arith.constant 0 : i32
    %c0_i32_1 = arith.constant 0 : i32
    return %c0_i32, %c0_i32_0 : i32, i32
  }
  func.func @transform_5(%arg0: i32, %arg1: i32) -> (i32, i32) {
    %c0_i32 = arith.constant 0 : i32
    %c0_i32_0 = arith.constant 0 : i32
    %c0_i32_1 = arith.constant 0 : i32
    return %c0_i32, %c0_i32_0 : i32, i32
  }
  func.func @transform_6(%arg0: i32, %arg1: i32) -> (i32, i32) {
    %c0_i32 = arith.constant 0 : i32
    %c0_i32_0 = arith.constant 0 : i32
    %c0_i32_1 = arith.constant 0 : i32
    return %c0_i32, %c0_i32_0 : i32, i32
  }
  func.func @transform_7(%arg0: i32, %arg1: i32) -> (i32, i32) {
    %c0_i32 = arith.constant 0 : i32
    %c0_i32_0 = arith.constant 0 : i32
    %c0_i32_1 = arith.constant 0 : i32
    return %c0_i32, %c0_i32_0 : i32, i32
  }
  func.func @transform_8(%arg0: i32, %arg1: i32) -> (i32, i32) {
    %c0_i32 = arith.constant 0 : i32
    %c0_i32_0 = arith.constant 0 : i32
    %c0_i32_1 = arith.constant 0 : i32
    return %c0_i32, %c0_i32_0 : i32, i32
  }
  func.func @transform_9(%arg0: i32, %arg1: i32) -> (i32, i32, i32) {
    %c0_i32 = arith.constant 0 : i32
    %c0_i32_0 = arith.constant 0 : i32
    return %arg0, %arg1, %c0_i32 : i32, i32, i32
  }
  func.func @transform_10(%arg0: i32, %arg1: i32) -> (i32, i32, i32) {
    %c0_i32 = arith.constant 0 : i32
    %c0_i32_0 = arith.constant 0 : i32
    return %arg0, %arg1, %c0_i32 : i32, i32, i32
  }
  func.func @transform_11(%arg0: i32, %arg1: i32) -> (i32, i32, i32) {
    %c0_i32 = arith.constant 0 : i32
    %c0_i32_0 = arith.constant 0 : i32
    return %arg0, %arg1, %c0_i32 : i32, i32, i32
  }
}

</mosaic_0001>

<llo_original>
// kernel: tpu_custom_call.1
$region0: #{tpu_custom_call.1}
  #allocation0 [shape = 'u32[]', space=smem, size = 0x4, offset = 0x4, fixed_abs, tag = 'smem constant byte address 0x4 - core index']
  #allocation1 [shape = 'u32[144,128]{1,0:T(1,128)}', space=vmem, size = 0x12000, scoped, tag = 'internal scratch']
  %s0 = inlined_call_operand.hbm [shape: f32[2,64,256], index: 0, kind: input, shape index: {}]
  %s1 = inlined_call_operand.vmem [shape: f32[1,256], index: 1, kind: input, shape index: {}]
  %s2 = inlined_call_operand.vmem [shape: f32[1,256], index: 2, kind: input, shape index: {}]
  %s3 = inlined_call_operand.hbm [shape: bf16[256,256], index: 3, kind: input, shape index: {}]
  %s4 = inlined_call_operand.hbm [shape: bf16[256,256], index: 4, kind: input, shape index: {}]
  %s5 = inlined_call_operand.hbm [shape: bf16[256,256], index: 5, kind: input, shape index: {}]
  %s6 = inlined_call_operand.vmem [shape: f32[1,256], index: 6, kind: input, shape index: {}]
  %s7 = inlined_call_operand.vmem [shape: f32[1,256], index: 7, kind: input, shape index: {}]
  %s8 = inlined_call_operand.vmem [shape: f32[1,256], index: 8, kind: input, shape index: {}]
  %s9 = inlined_call_operand.hbm [shape: bf16[2,64,256], index: 9, kind: output, shape index: {0}]
  %s10 = inlined_call_operand.hbm [shape: bf16[2,64,256], index: 10, kind: output, shape index: {1}]
  %s11 = inlined_call_operand.hbm [shape: bf16[2,64,256], index: 11, kind: output, shape index: {2}]
  %12 = xla_tuple %s9, %s10, %s11
  %s13 = sld [smem:[#allocation0]]
  $region101: #{tpu_custom_call.1} parent=0
    _
  %s15 = ssub.s32 1, %s13
  %s16 = scalar_select 0, %s15, %s13
  $region1: #{tpu_custom_call.1} parent=0
    #allocation2 [shape = 'u8[131072]{0}', space=vmem, size = 0x20000, scoped, tag = 'input window, operand 0']
    #allocation3 [shape = 's32[2]{0}', space=sflag, size = 0x8, scoped, tag = 'scoped memory for tpu_custom_call.1']
    #allocation4 [shape = 's32[2]{0}', space=sflag, size = 0x8, scoped, tag = 'scoped memory for tpu_custom_call.1']
    #allocation5 [shape = 'u8[131072]{0}', space=vmem, size = 0x20000, scoped, tag = 'input window, operand 3, single buffered']
    #allocation6 [shape = 's32[1]{0}', space=sflag, size = 0x4, scoped, tag = 'scoped memory for tpu_custom_call.1']
    #allocation7 [shape = 'u8[131072]{0}', space=vmem, size = 0x20000, scoped, tag = 'input window, operand 4, single buffered']
    #allocation8 [shape = 'u8[131072]{0}', space=vmem, size = 0x20000, scoped, tag = 'input window, operand 5, single buffered']
    #allocation9 [shape = 's32[1]{0}', space=sflag, size = 0x4, scoped, tag = 'scoped memory for tpu_custom_call.1']
    #allocation10 [shape = 'u8[65536]{0}', space=vmem, size = 0x10000, scoped, tag = 'output window, operand 0']
    #allocation11 [shape = 'u8[65536]{0}', space=vmem, size = 0x10000, scoped, tag = 'output window, operand 1']
    #allocation12 [shape = 's32[2]{0}', space=sflag, size = 0x8, scoped, tag = 'scoped memory for tpu_custom_call.1']
    #allocation13 [shape = 'u8[65536]{0}', space=vmem, size = 0x10000, scoped, tag = 'output window, operand 2']
    %17 = vsyncpa [#allocation3], 0
    %s18 = scalar_lea.sflag [#allocation3], 1
    %19 = vsyncpa %s18, 0
    %20 = vsyncpa [#allocation6], 0
    %21 = vsyncpa [#allocation9], 0
    %22 = vsyncpa [#allocation4], 0
    %s23 = scalar_lea.sflag [#allocation4], 1
    %24 = vsyncpa %s23, 0
    %25 = vsyncpa [#allocation12], 0
    %s26 = scalar_lea.sflag [#allocation12], 1
    %27 = vsyncpa %s26, 0
    loop: start=0, step=1, limit=4
    $region2: #{tpu_custom_call.1} parent=1 // loop_pre_header
      _
    $region3: #{tpu_custom_call.1} parent=1 // loop_header
      %s29 = sphi 0, %s33
      %p30 = scmp.ge.s32.totalorder %s29, 4
      %s36 = sphi 0, %s48
      %s37 = sphi 0, %s44
      %s38 = sphi 0, %s36
      %s39 = sphi 0, %s37
      %s40 = sphi 0, %s38
      %s41 = sphi 0, %s39
      %s53 = sphi 0, %s55
      %s56 = sphi 0, %s53
      %s57 = sphi 0, %s56
      %s73 = sphi 0, %s57
      %s77 = sphi 0, %s77
      %s79 = sphi 0, %s77
      %s80 = sphi 0, %s79
      %s94 = sphi 0, %s80
      %s98 = sphi 0, %s98
      %s100 = sphi 0, %s98
      %s101 = sphi 0, %s100
      %s115 = sphi 0, %s101
      %s119 = sphi 0, %s119
      %s121 = sphi 0, %s119
      %s122 = sphi 0, %s121
      %s136 = sphi 0, %s122
      %s140 = sphi 0, %s140
      %s142 = sphi 0, %s140
      %s143 = sphi 0, %s142
      %s157 = sphi 0, %s143
      %s161 = sphi 0, %s161
      %s163 = sphi 0, %s161
      %s164 = sphi 0, %s163
      %s178 = sphi 0, %s164
      %s182 = sphi 0, %s182
      %s184 = sphi 0, %s182
      %s185 = sphi 0, %s184
      %s199 = sphi 0, %s185
      %s203 = sphi 0, %s203
      %s205 = sphi 0, %s203
      %s206 = sphi 0, %s205
      %s220 = sphi 0, %s206
      %s224 = sphi 0, %s224
      %s226 = sphi 0, %s224
      %s227 = sphi 0, %s226
      %s241 = sphi 0, %s227
      %s249 = sphi 0, %s251
      %s252 = sphi 0, %s249
      %s253 = sphi 0, %s252
      %s269 = sphi 0, %s253
      %s277 = sphi 0, %s279
      %s280 = sphi 0, %s277
      %s281 = sphi 0, %s280
      %s297 = sphi 0, %s281
      %s305 = sphi 0, %s307
      %s308 = sphi 0, %s305
      %s309 = sphi 0, %s308
      %s325 = sphi 0, %s309
    $region4: #{tpu_custom_call.1} parent=1 // loop_header_branch
      %32 = sbr.rel (%p30) target = $region8
    $region5: #{tpu_custom_call.1} parent=1 // loop_body
      %s34 = ssub.s32 %s29, 1
      %s35 = ssub.s32 %s29, 2
      %s42 = sadd.s32 1, %s37
      %p43 = scmp.ge.s32.totalorder %s42, 1
      %s44 = scalar_select %p43, 0, %s42
      %s45 = sadd.s32 1, %s36
      %s46 = scalar_select %p43, %s45, %s36
      %p47 = scmp.ge.s32.totalorder %s46, 2
      %s48 = scalar_select %p47, 0, %s46
      %s49 = ssub.s32 %s36, %s48
      %s50 = ssub.s32 %s37, %s44
      %s51 = sor.u32 %s49, %s50
      %p52 = scmp.eq.s32.totalorder %s51, 0
      %s54 = sadd.s32 %s53, 1
      %s55 = scalar_select %p52, %s53, %s54
      %p58 = pneg %p52
      %p59 = scmp.eq.s32.totalorder %s29, 1
      %p60 = por %p58, %p59
      %p61 = scmp.ne.s32.totalorder %s53, %s56
      %p62 = scmp.eq.s32.totalorder %s29, 0
      %p63 = por %p61, %p62
      %p64 = scmp.ne.s32.totalorder %s53, %s56
      %p65 = scmp.eq.s32.totalorder %s34, 1
      %p66 = por %p64, %p65
      %p67 = scmp.ne.s32.totalorder %s56, %s57
      %p68 = scmp.eq.s32.totalorder %s34, 0
      %p69 = por %p67, %p68
      %p70 = scmp.ne.s32.totalorder %s56, %s57
      %p71 = scmp.eq.s32.totalorder %s35, 1
      %p72 = por %p70, %p71
      %p74 = scmp.ne.s32.totalorder %s57, %s73
      %p75 = scmp.eq.s32.totalorder %s35, 0
      %p76 = por %p74, %p75
      %s78 = sadd.s32 %s77, 1
      %p81 = scmp.eq.s32.totalorder %s29, 1
      %p82 = scmp.ne.s32.totalorder %s77, %s79
      %p83 = scmp.eq.s32.totalorder %s29, 0
      %p84 = por %p82, %p83
      %p85 = scmp.ne.s32.totalorder %s77, %s79
      %p86 = scmp.eq.s32.totalorder %s34, 1
      %p87 = por %p85, %p86
      %p88 = scmp.ne.s32.totalorder %s79, %s80
      %p89 = scmp.eq.s32.totalorder %s34, 0
      %p90 = por %p88, %p89
      %p91 = scmp.ne.s32.totalorder %s79, %s80
      %p92 = scmp.eq.s32.totalorder %s35, 1
      %p93 = por %p91, %p92
      %p95 = scmp.ne.s32.totalorder %s80, %s94
      %p96 = scmp.eq.s32.totalorder %s35, 0
      %p97 = por %p95, %p96
      %s99 = sadd.s32 %s98, 1
      %p102 = scmp.eq.s32.totalorder %s29, 1
      %p103 = scmp.ne.s32.totalorder %s98, %s100
      %p104 = scmp.eq.s32.totalorder %s29, 0
      %p105 = por %p103, %p104
      %p106 = scmp.ne.s32.totalorder %s98, %s100
      %p107 = scmp.eq.s32.totalorder %s34, 1
      %p108 = por %p106, %p107
      %p109 = scmp.ne.s32.totalorder %s100, %s101
      %p110 = scmp.eq.s32.totalorder %s34, 0
      %p111 = por %p109, %p110
      %p112 = scmp.ne.s32.totalorder %s100, %s101
      %p113 = scmp.eq.s32.totalorder %s35, 1
      %p114 = por %p112, %p113
      %p116 = scmp.ne.s32.totalorder %s101, %s115
      %p117 = scmp.eq.s32.totalorder %s35, 0
      %p118 = por %p116, %p117
      %s120 = sadd.s32 %s119, 1
      %p123 = scmp.eq.s32.totalorder %s29, 1
      %p124 = scmp.ne.s32.totalorder %s119, %s121
      %p125 = scmp.eq.s32.totalorder %s29, 0
      %p126 = por %p124, %p125
      %p127 = scmp.ne.s32.totalorder %s119, %s121
      %p128 = scmp.eq.s32.totalorder %s34, 1
      %p129 = por %p127, %p128
      %p130 = scmp.ne.s32.totalorder %s121, %s122
      %p131 = scmp.eq.s32.totalorder %s34, 0
      %p132 = por %p130, %p131
      %p133 = scmp.ne.s32.totalorder %s121, %s122
      %p134 = scmp.eq.s32.totalorder %s35, 1
      %p135 = por %p133, %p134
      %p137 = scmp.ne.s32.totalorder %s122, %s136
      %p138 = scmp.eq.s32.totalorder %s35, 0
      %p139 = por %p137, %p138
      %s141 = sadd.s32 %s140, 1
      %p144 = scmp.eq.s32.totalorder %s29, 1
      %p145 = scmp.ne.s32.totalorder %s140, %s142
      %p146 = scmp.eq.s32.totalorder %s29, 0
      %p147 = por %p145, %p146
      %p148 = scmp.ne.s32.totalorder %s140, %s142
      %p149 = scmp.eq.s32.totalorder %s34, 1
      %p150 = por %p148, %p149
      %p151 = scmp.ne.s32.totalorder %s142, %s143
      %p152 = scmp.eq.s32.totalorder %s34, 0
      %p153 = por %p151, %p152
      %p154 = scmp.ne.s32.totalorder %s142, %s143
      %p155 = scmp.eq.s32.totalorder %s35, 1
      %p156 = por %p154, %p155
      %p158 = scmp.ne.s32.totalorder %s143, %s157
      %p159 = scmp.eq.s32.totalorder %s35, 0
      %p160 = por %p158, %p159
      %s162 = sadd.s32 %s161, 1
      %p165 = scmp.eq.s32.totalorder %s29, 1
      %p166 = scmp.ne.s32.totalorder %s161, %s163
      %p167 = scmp.eq.s32.totalorder %s29, 0
      %p168 = por %p166, %p167
      %p169 = scmp.ne.s32.totalorder %s161, %s163
      %p170 = scmp.eq.s32.totalorder %s34, 1
      %p171 = por %p169, %p170
      %p172 = scmp.ne.s32.totalorder %s163, %s164
      %p173 = scmp.eq.s32.totalorder %s34, 0
      %p174 = por %p172, %p173
      %p175 = scmp.ne.s32.totalorder %s163, %s164
      %p176 = scmp.eq.s32.totalorder %s35, 1
      %p177 = por %p175, %p176
      %p179 = scmp.ne.s32.totalorder %s164, %s178
      %p180 = scmp.eq.s32.totalorder %s35, 0
      %p181 = por %p179, %p180
      %s183 = sadd.s32 %s182, 1
      %p186 = scmp.eq.s32.totalorder %s29, 1
      %p187 = scmp.ne.s32.totalorder %s182, %s184
      %p188 = scmp.eq.s32.totalorder %s29, 0
      %p189 = por %p187, %p188
      %p190 = scmp.ne.s32.totalorder %s182, %s184
      %p191 = scmp.eq.s32.totalorder %s34, 1
      %p192 = por %p190, %p191
      %p193 = scmp.ne.s32.totalorder %s184, %s185
      %p194 = scmp.eq.s32.totalorder %s34, 0
      %p195 = por %p193, %p194
      %p196 = scmp.ne.s32.totalorder %s184, %s185
      %p197 = scmp.eq.s32.totalorder %s35, 1
      %p198 = por %p196, %p197
      %p200 = scmp.ne.s32.totalorder %s185, %s199
      %p201 = scmp.eq.s32.totalorder %s35, 0
      %p202 = por %p200, %p201
      %s204 = sadd.s32 %s203, 1
      %p207 = scmp.eq.s32.totalorder %s29, 1
      %p208 = scmp.ne.s32.totalorder %s203, %s205
      %p209 = scmp.eq.s32.totalorder %s29, 0
      %p210 = por %p208, %p209
      %p211 = scmp.ne.s32.totalorder %s203, %s205
      %p212 = scmp.eq.s32.totalorder %s34, 1
      %p213 = por %p211, %p212
      %p214 = scmp.ne.s32.totalorder %s205, %s206
      %p215 = scmp.eq.s32.totalorder %s34, 0
      %p216 = por %p214, %p215
      %p217 = scmp.ne.s32.totalorder %s205, %s206
      %p218 = scmp.eq.s32.totalorder %s35, 1
      %p219 = por %p217, %p218
      %p221 = scmp.ne.s32.totalorder %s206, %s220
      %p222 = scmp.eq.s32.totalorder %s35, 0
      %p223 = por %p221, %p222
      %s225 = sadd.s32 %s224, 1
      %p228 = scmp.eq.s32.totalorder %s29, 1
      %p229 = scmp.ne.s32.totalorder %s224, %s226
      %p230 = scmp.eq.s32.totalorder %s29, 0
      %p231 = por %p229, %p230
      %p232 = scmp.ne.s32.totalorder %s224, %s226
      %p233 = scmp.eq.s32.totalorder %s34, 1
      %p234 = por %p232, %p233
      %p235 = scmp.ne.s32.totalorder %s226, %s227
      %p236 = scmp.eq.s32.totalorder %s34, 0
      %p237 = por %p235, %p236
      %p238 = scmp.ne.s32.totalorder %s226, %s227
      %p239 = scmp.eq.s32.totalorder %s35, 1
      %p240 = por %p238, %p239
      %p242 = scmp.ne.s32.totalorder %s227, %s241
      %p243 = scmp.eq.s32.totalorder %s35, 0
      %p244 = por %p242, %p243
      %s245 = ssub.s32 %s36, %s48
      %s246 = ssub.s32 %s37, %s44
      %s247 = sor.u32 %s245, %s246
      %p248 = scmp.eq.s32.totalorder %s247, 0
      %s250 = sadd.s32 %s249, 1
      %s251 = scalar_select %p248, %s249, %s250
      %p254 = pneg %p248
      %p255 = scmp.eq.s32.totalorder %s29, 1
      %p256 = por %p254, %p255
      %p257 = scmp.ne.s32.totalorder %s249, %s252
      %p258 = scmp.eq.s32.totalorder %s29, 0
      %p259 = por %p257, %p258
      %p260 = scmp.ne.s32.totalorder %s249, %s252
      %p261 = scmp.eq.s32.totalorder %s34, 1
      %p262 = por %p260, %p261
      %p263 = scmp.ne.s32.totalorder %s252, %s253
      %p264 = scmp.eq.s32.totalorder %s34, 0
      %p265 = por %p263, %p264
      %p266 = scmp.ne.s32.totalorder %s252, %s253
      %p267 = scmp.eq.s32.totalorder %s35, 1
      %p268 = por %p266, %p267
      %p270 = scmp.ne.s32.totalorder %s253, %s269
      %p271 = scmp.eq.s32.totalorder %s35, 0
      %p272 = por %p270, %p271
      %s273 = ssub.s32 %s36, %s48
      %s274 = ssub.s32 %s37, %s44
      %s275 = sor.u32 %s273, %s274
      %p276 = scmp.eq.s32.totalorder %s275, 0
      %s278 = sadd.s32 %s277, 1
      %s279 = scalar_select %p276, %s277, %s278
      %p282 = pneg %p276
      %p283 = scmp.eq.s32.totalorder %s29, 1
      %p284 = por %p282, %p283
      %p285 = scmp.ne.s32.totalorder %s277, %s280
      %p286 = scmp.eq.s32.totalorder %s29, 0
      %p287 = por %p285, %p286
      %p288 = scmp.ne.s32.totalorder %s277, %s280
      %p289 = scmp.eq.s32.totalorder %s34, 1
      %p290 = por %p288, %p289
      %p291 = scmp.ne.s32.totalorder %s280, %s281
      %p292 = scmp.eq.s32.totalorder %s34, 0
      %p293 = por %p291, %p292
      %p294 = scmp.ne.s32.totalorder %s280, %s281
      %p295 = scmp.eq.s32.totalorder %s35, 1
      %p296 = por %p294, %p295
      %p298 = scmp.ne.s32.totalorder %s281, %s297
      %p299 = scmp.eq.s32.totalorder %s35, 0
      %p300 = por %p298, %p299
      %s301 = ssub.s32 %s36, %s48
      %s302 = ssub.s32 %s37, %s44
      %s303 = sor.u32 %s301, %s302
      %p304 = scmp.eq.s32.totalorder %s303, 0
      %s306 = sadd.s32 %s305, 1
      %s307 = scalar_select %p304, %s305, %s306
      %p310 = pneg %p304
      %p311 = scmp.eq.s32.totalorder %s29, 1
      %p312 = por %p310, %p311
      %p313 = scmp.ne.s32.totalorder %s305, %s308
      %p314 = scmp.eq.s32.totalorder %s29, 0
      %p315 = por %p313, %p314
      %p316 = scmp.ne.s32.totalorder %s305, %s308
      %p317 = scmp.eq.s32.totalorder %s34, 1
      %p318 = por %p316, %p317
      %p319 = scmp.ne.s32.totalorder %s308, %s309
      %p320 = scmp.eq.s32.totalorder %s34, 0
      %p321 = por %p319, %p320
      %p322 = scmp.ne.s32.totalorder %s308, %s309
      %p323 = scmp.eq.s32.totalorder %s35, 1
      %p324 = por %p322, %p323
      %p326 = scmp.ne.s32.totalorder %s309, %s325
      %p327 = scmp.eq.s32.totalorder %s35, 0
      %p328 = por %p326, %p327
      %p329 = scmp.le.s32.totalorder 1, %s29
      %p330 = scmp.lt.s32.totalorder %s29, 3
      %p331 = pnand %p329, %p330
      %p332 = pneg %p331
      // Predicated region
      $region9: #{tpu_custom_call.1} parent=5 // pred_check
        _
      $region10: #{tpu_custom_call.1} parent=5 // pred_check_branch
        %334 = sbr.rel (%p331) target = $region12
      $region11: #{tpu_custom_call.1} parent=5 // pred_region
        %s335 = ssub.s32 %s29, 1
        // Predicated region
        $region13: #{tpu_custom_call.1} parent=11 // pred_check
          %p336 = pneg %p90
        $region14: #{tpu_custom_call.1} parent=11 // pred_check_branch
          %338 = sbr.rel (%p336) target = $region16
        $region15: #{tpu_custom_call.1} parent=11 // pred_region
          _
        $region16: #{tpu_custom_call.1} parent=11 // pred_fallthru
          _
        // Predicated region
        $region17: #{tpu_custom_call.1} parent=11 // pred_check
          %p339 = pneg %p111
        $region18: #{tpu_custom_call.1} parent=11 // pred_check_branch
          %341 = sbr.rel (%p339) target = $region20
        $region19: #{tpu_custom_call.1} parent=11 // pred_region
          _
        $region20: #{tpu_custom_call.1} parent=11 // pred_fallthru
          _
        // Predicated region
        $region21: #{tpu_custom_call.1} parent=11 // pred_check
          %p342 = pneg %p132
        $region22: #{tpu_custom_call.1} parent=11 // pred_check_branch
          %344 = sbr.rel (%p342) target = $region24
        $region23: #{tpu_custom_call.1} parent=11 // pred_region
          %s346 = ssub.s32 4096, 4096
          %347 = vsyncadd [#allocation6], %s346
          %s348 = sshll.u32 [#allocation5], 4
          %s349 = int_to_ptr.vmem [resolvable:$true] %s348
          %354 = dma.hbm_to_vmem [thread:$0]  %s3, 4096, %s349, [#allocation6], 128, 128, 8
        $region24: #{tpu_custom_call.1} parent=11 // pred_fallthru
          _
        // Predicated region
        $region25: #{tpu_custom_call.1} parent=11 // pred_check
          %p355 = pneg %p153
        $region26: #{tpu_custom_call.1} parent=11 // pred_check_branch
          %357 = sbr.rel (%p355) target = $region28
        $region27: #{tpu_custom_call.1} parent=11 // pred_region
          %s359 = ssub.s32 4096, 4096
          %360 = vsyncadd [#allocation6], %s359
          %s361 = sshll.u32 [#allocation7], 4
          %s362 = int_to_ptr.vmem [resolvable:$true] %s361
          %367 = dma.hbm_to_vmem [thread:$0]  %s4, 4096, %s362, [#allocation6], 128, 128, 8
        $region28: #{tpu_custom_call.1} parent=11 // pred_fallthru
          _
        // Predicated region
        $region29: #{tpu_custom_call.1} parent=11 // pred_check
          %p368 = pneg %p174
        $region30: #{tpu_custom_call.1} parent=11 // pred_check_branch
          %370 = sbr.rel (%p368) target = $region32
        $region31: #{tpu_custom_call.1} parent=11 // pred_region
          %s372 = ssub.s32 4096, 4096
          %373 = vsyncadd [#allocation9], %s372
          %s374 = sshll.u32 [#allocation8], 4
          %s375 = int_to_ptr.vmem [resolvable:$true] %s374
          %380 = dma.hbm_to_vmem [thread:$0]  %s5, 4096, %s375, [#allocation9], 128, 128, 8
        $region32: #{tpu_custom_call.1} parent=11 // pred_fallthru
          _
        // Predicated region
        $region33: #{tpu_custom_call.1} parent=11 // pred_check
          %p381 = pneg %p195
        $region34: #{tpu_custom_call.1} parent=11 // pred_check_branch
          %383 = sbr.rel (%p381) target = $region36
        $region35: #{tpu_custom_call.1} parent=11 // pred_region
          _
        $region36: #{tpu_custom_call.1} parent=11 // pred_fallthru
          _
        // Predicated region
        $region37: #{tpu_custom_call.1} parent=11 // pred_check
          %p384 = pneg %p216
        $region38: #{tpu_custom_call.1} parent=11 // pred_check_branch
          %386 = sbr.rel (%p384) target = $region40
        $region39: #{tpu_custom_call.1} parent=11 // pred_region
          _
        $region40: #{tpu_custom_call.1} parent=11 // pred_fallthru
          _
        // Predicated region
        $region41: #{tpu_custom_call.1} parent=11 // pred_check
          %p387 = pneg %p237
        $region42: #{tpu_custom_call.1} parent=11 // pred_check_branch
          %389 = sbr.rel (%p387) target = $region44
        $region43: #{tpu_custom_call.1} parent=11 // pred_region
          _
        $region44: #{tpu_custom_call.1} parent=11 // pred_fallthru
          _
      $region12: #{tpu_custom_call.1} parent=5 // pred_fallthru
        _
      %p390 = scmp.lt.s32.totalorder %s29, 2
      // Predicated region
      $region45: #{tpu_custom_call.1} parent=5 // pred_check
        %p391 = pneg %p390
      $region46: #{tpu_custom_call.1} parent=5 // pred_check_branch
        %393 = sbr.rel (%p391) target = $region48
      $region47: #{tpu_custom_call.1} parent=5 // pred_region
        // Predicated region
        $region49: #{tpu_custom_call.1} parent=47 // pred_check
          %p394 = pneg %p63
        $region50: #{tpu_custom_call.1} parent=47 // pred_check_branch
          %396 = sbr.rel (%p394) target = $region52
        $region51: #{tpu_custom_call.1} parent=47 // pred_region
          %s397 = sand.u32 %s53, 1
          %s398 = scalar_lea.sflag [#allocation3], %s397
          %s399 = sand.u32 %s53, 1
          %s400 = smul.addr %s399, 128
          %s401 = scalar_lea.vmem [#allocation2], %s400
          %s402 = smul.u32 8, %s37
          %s404 = ssub.s32 2048, 2048
          %405 = vsyncadd %s398, %s404
          %s406 = smul.addr %s402, 2
          %s407 = smul.addr %s36, 16
          %s408 = sadd.s32 %s406, %s407
          %s409 = smul.addr %s408, 128
          %s410 = scalar_lea.hbm %s0, %s409
          %s411 = sshll.u32 %s401, 4
          %s412 = int_to_ptr.vmem [resolvable:$true] %s411
          %417 = dma.hbm_to_vmem [thread:$0]  %s410, 2048, %s412, %s398, 256, 256, 16
        $region52: #{tpu_custom_call.1} parent=47 // pred_fallthru
          _
      $region48: #{tpu_custom_call.1} parent=5 // pred_fallthru
        _
      %p418 = scmp.le.s32.totalorder 1, %s29
      %p419 = scmp.lt.s32.totalorder %s29, 3
      %p420 = pnand %p418, %p419
      %p421 = pneg %p420
      // Predicated region
      $region53: #{tpu_custom_call.1} parent=5 // pred_check
        _
      $region54: #{tpu_custom_call.1} parent=5 // pred_check_branch
        %423 = sbr.rel (%p420) target = $region56
      $region55: #{tpu_custom_call.1} parent=5 // pred_region
        %s424 = ssub.s32 %s29, 1
        %s425 = sand.u32 %s56, 1
        %s426 = scalar_lea.sflag [#allocation3], %s425
        %s427 = sand.u32 %s56, 1
        %s428 = smul.addr %s427, 128
        %s429 = scalar_lea.vmem [#allocation2], %s428
        // Predicated region
        $region57: #{tpu_custom_call.1} parent=55 // pred_check
          %p430 = pneg %p69
        $region58: #{tpu_custom_call.1} parent=55 // pred_check_branch
          %432 = sbr.rel (%p430) target = $region60
        $region59: #{tpu_custom_call.1} parent=55 // pred_region
          %433 = dma.done %s426, 2048
        $region60: #{tpu_custom_call.1} parent=55 // pred_fallthru
          _
        // Predicated region
        $region61: #{tpu_custom_call.1} parent=55 // pred_check
          %p434 = pneg %p132
        $region62: #{tpu_custom_call.1} parent=55 // pred_check_branch
          %436 = sbr.rel (%p434) target = $region64
        $region63: #{tpu_custom_call.1} parent=55 // pred_region
          %437 = dma.done [#allocation6], 4096
        $region64: #{tpu_custom_call.1} parent=55 // pred_fallthru
          _
        // Predicated region
        $region65: #{tpu_custom_call.1} parent=55 // pred_check
          %p438 = pneg %p153
        $region66: #{tpu_custom_call.1} parent=55 // pred_check_branch
          %440 = sbr.rel (%p438) target = $region68
        $region67: #{tpu_custom_call.1} parent=55 // pred_region
          %441 = dma.done [#allocation6], 4096
        $region68: #{tpu_custom_call.1} parent=55 // pred_fallthru
          _
        // Predicated region
        $region69: #{tpu_custom_call.1} parent=55 // pred_check
          %p442 = pneg %p174
        $region70: #{tpu_custom_call.1} parent=55 // pred_check_branch
          %444 = sbr.rel (%p442) target = $region72
        $region71: #{tpu_custom_call.1} parent=55 // pred_region
          %445 = dma.done [#allocation9], 4096
        $region72: #{tpu_custom_call.1} parent=55 // pred_fallthru
          _
        %s446 = sand.u32 %s56, 1
        %s447 = scalar_lea.sflag [#allocation3], %s446
        %s448 = sand.u32 %s56, 1
        %s449 = smul.addr %s448, 128
        %s450 = scalar_lea.vmem [#allocation2], %s449
        %p451 = pneg %p69
        %p452 = pneg %p66
        %p453 = pneg %p90
        %p454 = pneg %p87
        %p455 = pneg %p111
        %p456 = pneg %p108
        %p457 = pneg %p132
        %p458 = pneg %p129
        %p459 = pneg %p153
        %p460 = pneg %p150
        %p461 = pneg %p174
        %p462 = pneg %p171
        %p463 = pneg %p195
        %p464 = pneg %p192
        %p465 = pneg %p216
        %p466 = pneg %p213
        %p467 = pneg %p237
        %p468 = pneg %p234
        %p469 = pneg %p265
        %p470 = pneg %p262
        %s471 = sand.u32 %s252, 1
        %s472 = scalar_lea.sflag [#allocation4], %s471
        %s473 = sand.u32 %s252, 1
        %s474 = smul.addr %s473, 64
        %s475 = scalar_lea.vmem [#allocation10], %s474
        %p476 = pneg %p293
        %p477 = pneg %p290
        %s478 = sand.u32 %s34, 1
        %s479 = scalar_lea.sflag [#allocation12], %s478
        %s480 = sand.u32 %s280, 1
        %s481 = smul.addr %s480, 64
        %s482 = scalar_lea.vmem [#allocation11], %s481
        %p483 = pneg %p321
        %p484 = pneg %p318
        %s485 = sand.u32 %s34, 1
        %s486 = scalar_lea.sflag [#allocation12], %s485
        %s487 = sand.u32 %s308, 1
        %s488 = smul.addr %s487, 64
        %s489 = scalar_lea.vmem [#allocation13], %s488
        %s490 = smul.u32 8, %s39
        %s491 = smul.u32 8, %s39
        %s492 = smul.u32 8, %s39
        %s493 = smul.u32 8, %s39
        %v494 = vld [vmem:[%s429] sm:$0xff]
        %v495 = vld [vmem:[%s429 + $0x8] sm:$0xff]
        %v496 = vld [vmem:[%s429 + $0x10] sm:$0xff]
        %v497 = vld [vmem:[%s429 + $0x18] sm:$0xff]
        %v498 = vld [vmem:[%s429 + $0x20] sm:$0xff]
        %v499 = vld [vmem:[%s429 + $0x28] sm:$0xff]
        %v500 = vld [vmem:[%s429 + $0x30] sm:$0xff]
        %v501 = vld [vmem:[%s429 + $0x38] sm:$0xff]
        %v502 = vld [vmem:[%s429 + $0x40] sm:$0xff]
        %v503 = vld [vmem:[%s429 + $0x48] sm:$0xff]
        %v504 = vld [vmem:[%s429 + $0x50] sm:$0xff]
        %v505 = vld [vmem:[%s429 + $0x58] sm:$0xff]
        %v506 = vld [vmem:[%s429 + $0x60] sm:$0xff]
        %v507 = vld [vmem:[%s429 + $0x68] sm:$0xff]
        %v508 = vld [vmem:[%s429 + $0x70] sm:$0xff]
        %v509 = vld [vmem:[%s429 + $0x78] sm:$0xff]
        %v510 = vld [vmem:[%s1] sm:$0x3]
        %v511 = vld [vmem:[%s2] sm:$0x3]
        %v512 = vadd.f32 %v494, %v495
        %513 = vadd.xlane.f32.xlu0 %v512
        %v514 = vpop.xlane.xlu0 %513
        %v515 = vadd.f32 %v496, %v497
        %516 = vadd.xlane.f32.xlu0 %v515
        %v517 = vpop.xlane.xlu0 %516
        %v518 = vadd.f32 %v498, %v499
        %519 = vadd.xlane.f32.xlu0 %v518
        %v520 = vpop.xlane.xlu0 %519
        %v521 = vadd.f32 %v500, %v501
        %522 = vadd.xlane.f32.xlu0 %v521
        %v523 = vpop.xlane.xlu0 %522
        %v524 = vadd.f32 %v502, %v503
        %525 = vadd.xlane.f32.xlu0 %v524
        %v526 = vpop.xlane.xlu0 %525
        %v527 = vadd.f32 %v504, %v505
        %528 = vadd.xlane.f32.xlu0 %v527
        %v529 = vpop.xlane.xlu0 %528
        %v530 = vadd.f32 %v506, %v507
        %531 = vadd.xlane.f32.xlu0 %v530
        %v532 = vpop.xlane.xlu0 %531
        %v533 = vadd.f32 %v508, %v509
        %534 = vadd.xlane.f32.xlu0 %v533
        %v535 = vpop.xlane.xlu0 %534
        %v536 = vrcp.pop 256.0
        %v537 = vmul.f32 %v514, %v536
        %v538 = vmul.f32 %v517, %v536
        %v539 = vmul.f32 %v520, %v536
        %v540 = vmul.f32 %v523, %v536
        %v541 = vmul.f32 %v526, %v536
        %v542 = vmul.f32 %v529, %v536
        %v543 = vmul.f32 %v532, %v536
        %v544 = vmul.f32 %v535, %v536
        %v545 = vsub.f32 %v494, %v537
        %v546 = vsub.f32 %v495, %v537
        %v547 = vsub.f32 %v496, %v538
        %v548 = vsub.f32 %v497, %v538
        %v549 = vsub.f32 %v498, %v539
        %v550 = vsub.f32 %v499, %v539
        %v551 = vsub.f32 %v500, %v540
        %v552 = vsub.f32 %v501, %v540
        %v553 = vsub.f32 %v502, %v541
        %v554 = vsub.f32 %v503, %v541
        %v555 = vsub.f32 %v504, %v542
        %v556 = vsub.f32 %v505, %v542
        %v557 = vsub.f32 %v506, %v543
        %v558 = vsub.f32 %v507, %v543
        %v559 = vsub.f32 %v508, %v544
        %v560 = vsub.f32 %v509, %v544
        %v561 = vmul.f32 %v545, %v545
        %v562 = vmul.f32 %v546, %v546
        %v563 = vmul.f32 %v547, %v547
        %v564 = vmul.f32 %v548, %v548
        %v565 = vmul.f32 %v549, %v549
        %v566 = vmul.f32 %v550, %v550
        %v567 = vmul.f32 %v551, %v551
        %v568 = vmul.f32 %v552, %v552
        %v569 = vmul.f32 %v553, %v553
        %v570 = vmul.f32 %v554, %v554
        %v571 = vmul.f32 %v555, %v555
        %v572 = vmul.f32 %v556, %v556
        %v573 = vmul.f32 %v557, %v557
        %v574 = vmul.f32 %v558, %v558
        %v575 = vmul.f32 %v559, %v559
        %v576 = vmul.f32 %v560, %v560
        %v577 = vadd.f32 %v561, %v562
        %578 = vadd.xlane.f32.xlu0 %v577
        %v579 = vpop.xlane.xlu0 %578
        %v580 = vadd.f32 %v563, %v564
        %581 = vadd.xlane.f32.xlu0 %v580
        %v582 = vpop.xlane.xlu0 %581
        %v583 = vadd.f32 %v565, %v566
        %584 = vadd.xlane.f32.xlu0 %v583
        %v585 = vpop.xlane.xlu0 %584
        %v586 = vadd.f32 %v567, %v568
        %587 = vadd.xlane.f32.xlu0 %v586
        %v588 = vpop.xlane.xlu0 %587
        %v589 = vadd.f32 %v569, %v570
        %590 = vadd.xlane.f32.xlu0 %v589
        %v591 = vpop.xlane.xlu0 %590
        %v592 = vadd.f32 %v571, %v572
        %593 = vadd.xlane.f32.xlu0 %v592
        %v594 = vpop.xlane.xlu0 %593
        %v595 = vadd.f32 %v573, %v574
        %596 = vadd.xlane.f32.xlu0 %v595
        %v597 = vpop.xlane.xlu0 %596
        %v598 = vadd.f32 %v575, %v576
        %599 = vadd.xlane.f32.xlu0 %v598
        %v600 = vpop.xlane.xlu0 %599
        %v601 = vmul.f32 %v579, %v536
        %v602 = vmul.f32 %v582, %v536
        %v603 = vmul.f32 %v585, %v536
        %v604 = vmul.f32 %v588, %v536
        %v605 = vmul.f32 %v591, %v536
        %v606 = vmul.f32 %v594, %v536
        %v607 = vmul.f32 %v597, %v536
        %v608 = vmul.f32 %v600, %v536
        %v609 = vadd.f32 %v601, 1e-06
        %v610 = vadd.f32 %v602, 1e-06
        %v611 = vadd.f32 %v603, 1e-06
        %v612 = vadd.f32 %v604, 1e-06
        %v613 = vadd.f32 %v605, 1e-06
        %v614 = vadd.f32 %v606, 1e-06
        %v615 = vadd.f32 %v607, 1e-06
        %v616 = vadd.f32 %v608, 1e-06
        %v617 = vrsqrt.pop %v609
        %v618 = vrsqrt.pop %v610
        %v619 = vrsqrt.pop %v611
        %v620 = vrsqrt.pop %v612
        %v621 = vrsqrt.pop %v613
        %v622 = vrsqrt.pop %v614
        %v623 = vrsqrt.pop %v615
        %v624 = vrsqrt.pop %v616
        %v625 = vmul.f32 %v545, %v617
        %v626 = vmul.f32 %v546, %v617
        %v627 = vmul.f32 %v547, %v618
        %v628 = vmul.f32 %v548, %v618
        %v629 = vmul.f32 %v549, %v619
        %v630 = vmul.f32 %v550, %v619
        %v631 = vmul.f32 %v551, %v620
        %v632 = vmul.f32 %v552, %v620
        %v633 = vmul.f32 %v553, %v621
        %v634 = vmul.f32 %v554, %v621
        %v635 = vmul.f32 %v555, %v622
        %v636 = vmul.f32 %v556, %v622
        %v637 = vmul.f32 %v557, %v623
        %v638 = vmul.f32 %v558, %v623
        %v639 = vmul.f32 %v559, %v624
        %v640 = vmul.f32 %v560, %v624
        %v642 = vlaneseq
        %v643 = vshrl.u32 %v642, 7
        %v644 = vsub.s32 0, %v643
        %v645 = vrot.slane %v510, %v644
        %v646 = vlaneseq
        %v647 = vshrl.u32 %v646, 7
        %v648 = vsub.s32 1, %v647
        %v649 = vrot.slane %v510, %v648
        %v652 = vmul.f32 %v625, %v645
        %v653 = vmul.f32 %v626, %v649
        %v654 = vmul.f32 %v627, %v645
        %v655 = vmul.f32 %v628, %v649
        %v656 = vmul.f32 %v629, %v645
        %v657 = vmul.f32 %v630, %v649
        %v658 = vmul.f32 %v631, %v645
        %v659 = vmul.f32 %v632, %v649
        %v660 = vmul.f32 %v633, %v645
        %v661 = vmul.f32 %v634, %v649
        %v662 = vmul.f32 %v635, %v645
        %v663 = vmul.f32 %v636, %v649
        %v664 = vmul.f32 %v637, %v645
        %v665 = vmul.f32 %v638, %v649
        %v666 = vmul.f32 %v639, %v645
        %v667 = vmul.f32 %v640, %v649
        %v669 = vlaneseq
        %v670 = vshrl.u32 %v669, 7
        %v671 = vsub.s32 0, %v670
        %v672 = vrot.slane %v511, %v671
        %v673 = vlaneseq
        %v674 = vshrl.u32 %v673, 7
        %v675 = vsub.s32 1, %v674
        %v676 = vrot.slane %v511, %v675
        %v679 = vadd.f32 %v652, %v672
        %v680 = vadd.f32 %v653, %v676
        %v681 = vadd.f32 %v654, %v672
        %v682 = vadd.f32 %v655, %v676
        %v683 = vadd.f32 %v656, %v672
        %v684 = vadd.f32 %v657, %v676
        %v685 = vadd.f32 %v658, %v672
        %v686 = vadd.f32 %v659, %v676
        %v687 = vadd.f32 %v660, %v672
        %v688 = vadd.f32 %v661, %v676
        %v689 = vadd.f32 %v662, %v672
        %v690 = vadd.f32 %v663, %v676
        %v691 = vadd.f32 %v664, %v672
        %v692 = vadd.f32 %v665, %v676
        %v693 = vadd.f32 %v666, %v672
        %v694 = vadd.f32 %v667, %v676
        %v695 = vpack.c.bf16 %v681, %v679
        %v696 = vpack.c.bf16 %v682, %v680
        %v697 = vpack.c.bf16 %v685, %v683
        %v698 = vpack.c.bf16 %v686, %v684
        %v699 = vpack.c.bf16 %v689, %v687
        %v700 = vpack.c.bf16 %v690, %v688
        %v701 = vpack.c.bf16 %v693, %v691
        %v702 = vpack.c.bf16 %v694, %v692
        %v703 = vld [vmem:[#allocation5] sm:$0xff]
        %v704 = vld [vmem:[#allocation5 + $0x8] sm:$0xff]
        %v705 = vld [vmem:[#allocation5 + $0x10] sm:$0xff]
        %v706 = vld [vmem:[#allocation5 + $0x18] sm:$0xff]
        %v707 = vld [vmem:[#allocation5 + $0x20] sm:$0xff]
        %v708 = vld [vmem:[#allocation5 + $0x28] sm:$0xff]
        %v709 = vld [vmem:[#allocation5 + $0x30] sm:$0xff]
        %v710 = vld [vmem:[#allocation5 + $0x38] sm:$0xff]
        %v711 = vld [vmem:[#allocation5 + $0x40] sm:$0xff]
        %v712 = vld [vmem:[#allocation5 + $0x48] sm:$0xff]
        %v713 = vld [vmem:[#allocation5 + $0x50] sm:$0xff]
        %v714 = vld [vmem:[#allocation5 + $0x58] sm:$0xff]
        %v715 = vld [vmem:[#allocation5 + $0x60] sm:$0xff]
        %v716 = vld [vmem:[#allocation5 + $0x68] sm:$0xff]
        %v717 = vld [vmem:[#allocation5 + $0x70] sm:$0xff]
        %v718 = vld [vmem:[#allocation5 + $0x78] sm:$0xff]
        %v719 = vld [vmem:[#allocation5 + $0x80] sm:$0xff]
        %v720 = vld [vmem:[#allocation5 + $0x88] sm:$0xff]
        %v721 = vld [vmem:[#allocation5 + $0x90] sm:$0xff]
        %v722 = vld [vmem:[#allocation5 + $0x98] sm:$0xff]
        %v723 = vld [vmem:[#allocation5 + $0xa0] sm:$0xff]
        %v724 = vld [vmem:[#allocation5 + $0xa8] sm:$0xff]
        %v725 = vld [vmem:[#allocation5 + $0xb0] sm:$0xff]
        %v726 = vld [vmem:[#allocation5 + $0xb8] sm:$0xff]
        %v727 = vld [vmem:[#allocation5 + $0xc0] sm:$0xff]
        %v728 = vld [vmem:[#allocation5 + $0xc8] sm:$0xff]
        %v729 = vld [vmem:[#allocation5 + $0xd0] sm:$0xff]
        %v730 = vld [vmem:[#allocation5 + $0xd8] sm:$0xff]
        %v731 = vld [vmem:[#allocation5 + $0xe0] sm:$0xff]
        %v732 = vld [vmem:[#allocation5 + $0xe8] sm:$0xff]
        %v733 = vld [vmem:[#allocation5 + $0xf0] sm:$0xff]
        %v734 = vld [vmem:[#allocation5 + $0xf8] sm:$0xff]
        %v735 = vld [vmem:[%s6] sm:$0x3]
        %v737 = vlaneseq
        %v738 = vshrl.u32 %v737, 7
        %v739 = vsub.s32 0, %v738
        %v740 = vrot.slane %v735, %v739
        %v741 = vlaneseq
        %v742 = vshrl.u32 %v741, 7
        %v743 = vsub.s32 1, %v742
        %v744 = vrot.slane %v735, %v743
        %v779 = vunpack.c.l.b16 %v703
        %v780 = vunpack.c.h.b16 %v703
        %v781 = vunpack.c.l.b16 %v704
        %v782 = vunpack.c.h.b16 %v704
        %v783 = vunpack.c.l.b16 %v705
        %v784 = vunpack.c.h.b16 %v705
        %v785 = vunpack.c.l.b16 %v706
        %v786 = vunpack.c.h.b16 %v706
        %v787 = vunpack.c.l.b16 %v707
        %v788 = vunpack.c.h.b16 %v707
        %v789 = vunpack.c.l.b16 %v708
        %v790 = vunpack.c.h.b16 %v708
        %v791 = vunpack.c.l.b16 %v709
        %v792 = vunpack.c.h.b16 %v709
        %v793 = vunpack.c.l.b16 %v710
        %v794 = vunpack.c.h.b16 %v710
        %v795 = vunpack.c.l.b16 %v711
        %v796 = vunpack.c.h.b16 %v711
        %v797 = vunpack.c.l.b16 %v712
        %v798 = vunpack.c.h.b16 %v712
        %v799 = vunpack.c.l.b16 %v713
        %v800 = vunpack.c.h.b16 %v713
        %v801 = vunpack.c.l.b16 %v714
        %v802 = vunpack.c.h.b16 %v714
        %v803 = vunpack.c.l.b16 %v715
        %v804 = vunpack.c.h.b16 %v715
        %v805 = vunpack.c.l.b16 %v716
        %v806 = vunpack.c.h.b16 %v716
        %v807 = vunpack.c.l.b16 %v717
        %v808 = vunpack.c.h.b16 %v717
        %v809 = vunpack.c.l.b16 %v718
        %v810 = vunpack.c.h.b16 %v718
        %v811 = vunpack.c.l.b16 %v719
        %v812 = vunpack.c.h.b16 %v719
        %v813 = vunpack.c.l.b16 %v720
        %v814 = vunpack.c.h.b16 %v720
        %v815 = vunpack.c.l.b16 %v721
        %v816 = vunpack.c.h.b16 %v721
        %v817 = vunpack.c.l.b16 %v722
        %v818 = vunpack.c.h.b16 %v722
        %v819 = vunpack.c.l.b16 %v723
        %v820 = vunpack.c.h.b16 %v723
        %v821 = vunpack.c.l.b16 %v724
        %v822 = vunpack.c.h.b16 %v724
        %v823 = vunpack.c.l.b16 %v725
        %v824 = vunpack.c.h.b16 %v725
        %v825 = vunpack.c.l.b16 %v726
        %v826 = vunpack.c.h.b16 %v726
        %v827 = vunpack.c.l.b16 %v727
        %v828 = vunpack.c.h.b16 %v727
        %v829 = vunpack.c.l.b16 %v728
        %v830 = vunpack.c.h.b16 %v728
        %v831 = vunpack.c.l.b16 %v729
        %v832 = vunpack.c.h.b16 %v729
        %v833 = vunpack.c.l.b16 %v730
        %v834 = vunpack.c.h.b16 %v730
        %v835 = vunpack.c.l.b16 %v731
        %v836 = vunpack.c.h.b16 %v731
        %v837 = vunpack.c.l.b16 %v732
        %v838 = vunpack.c.h.b16 %v732
        %v839 = vunpack.c.l.b16 %v733
        %v840 = vunpack.c.h.b16 %v733
        %v841 = vunpack.c.l.b16 %v734
        %v842 = vunpack.c.h.b16 %v734
        %v843 = vpack.c.b16 %v781, %v779
        %v844 = vpack.c.b16 %v782, %v780
        %v845 = vpack.c.b16 %v785, %v783
        %v846 = vpack.c.b16 %v786, %v784
        %v847 = vpack.c.b16 %v789, %v787
        %v848 = vpack.c.b16 %v790, %v788
        %v849 = vpack.c.b16 %v793, %v791
        %v850 = vpack.c.b16 %v794, %v792
        %v851 = vpack.c.b16 %v797, %v795
        %v852 = vpack.c.b16 %v798, %v796
        %v853 = vpack.c.b16 %v801, %v799
        %v854 = vpack.c.b16 %v802, %v800
        %v855 = vpack.c.b16 %v805, %v803
        %v856 = vpack.c.b16 %v806, %v804
        %v857 = vpack.c.b16 %v809, %v807
        %v858 = vpack.c.b16 %v810, %v808
        %v859 = vpack.c.b16 %v813, %v811
        %v860 = vpack.c.b16 %v814, %v812
        %v861 = vpack.c.b16 %v817, %v815
        %v862 = vpack.c.b16 %v818, %v816
        %v863 = vpack.c.b16 %v821, %v819
        %v864 = vpack.c.b16 %v822, %v820
        %v865 = vpack.c.b16 %v825, %v823
        %v866 = vpack.c.b16 %v826, %v824
        %v867 = vpack.c.b16 %v829, %v827
        %v868 = vpack.c.b16 %v830, %v828
        %v869 = vpack.c.b16 %v833, %v831
        %v870 = vpack.c.b16 %v834, %v832
        %v871 = vpack.c.b16 %v837, %v835
        %v872 = vpack.c.b16 %v838, %v836
        %v873 = vpack.c.b16 %v841, %v839
        %v874 = vpack.c.b16 %v842, %v840
        %907 = vmatprep.subr.bf16.mxu0 %v844
        %908 = vmatpush1.bf16.msra.mxu0 %v843
        %909 = vmatprep.subr.bf16.mxu0 %v846
        %910 = vmatpush1.bf16.msra.mxu0 %v845
        %911 = vmatprep.subr.bf16.mxu0 %v848
        %912 = vmatpush1.bf16.msra.mxu0 %v847
        %913 = vmatprep.subr.bf16.mxu0 %v850
        %914 = vmatpush1.bf16.msra.mxu0 %v849
        %915 = vmatprep.subr.bf16.mxu0 %v852
        %916 = vmatpush1.bf16.msra.mxu0 %v851
        %917 = vmatprep.subr.bf16.mxu0 %v854
        %918 = vmatpush1.bf16.msra.mxu0 %v853
        %919 = vmatprep.subr.bf16.mxu0 %v856
        %920 = vmatpush1.bf16.msra.mxu0 %v855
        %921 = vmatprep.subr.bf16.mxu0 %v858
        %922 = vmatpush1.bf16.msra.mxu0 %v857
        %923 = vmatprep.subr.bf16.mxu0 %v860
        %924 = vmatpush1.bf16.msra.mxu0 %v859
        %925 = vmatprep.subr.bf16.mxu0 %v862
        %926 = vmatpush1.bf16.msra.mxu0 %v861
        %927 = vmatprep.subr.bf16.mxu0 %v864
        %928 = vmatpush1.bf16.msra.mxu0 %v863
        %929 = vmatprep.subr.bf16.mxu0 %v866
        %930 = vmatpush1.bf16.msra.mxu0 %v865
        %931 = vmatprep.subr.bf16.mxu0 %v868
        %932 = vmatpush1.bf16.msra.mxu0 %v867
        %933 = vmatprep.subr.bf16.mxu0 %v870
        %934 = vmatpush1.bf16.msra.mxu0 %v869
        %935 = vmatprep.subr.bf16.mxu0 %v872
        %936 = vmatpush1.bf16.msra.mxu0 %v871
        %937 = vmatprep.subr.bf16.mxu0 %v874
        %938 = vmatpush1.bf16.msra.mxu0 %v873
        %939 = vmatprep.mubr.bf16.mxu0 %v696
        %940 = vmatmul.mubr.bf16.gmra.mrb[0].mxu0 %v695
        %v941 = vpop.f32.mrb[0].mxu0
        %v942 = vadd.f32 %v740, %v941
        %v943 = vpop.f32.mrb[0].mxu0
        %v944 = vadd.f32 %v744, %v943
        %v945 = vpop.f32.mrb[0].mxu0
        %v946 = vadd.f32 %v740, %v945
        %v947 = vpop.f32.mrb[0].mxu0
        %v948 = vadd.f32 %v744, %v947
        %949 = vmatprep.mubr.bf16.mxu0 %v698
        %950 = vmatmul.mubr.bf16.gmra.mrb[0].mxu0 %v697
        %v951 = vpop.f32.mrb[0].mxu0
        %v952 = vadd.f32 %v740, %v951
        %v953 = vpop.f32.mrb[0].mxu0
        %v954 = vadd.f32 %v744, %v953
        %v955 = vpop.f32.mrb[0].mxu0
        %v956 = vadd.f32 %v740, %v955
        %v957 = vpop.f32.mrb[0].mxu0
        %v958 = vadd.f32 %v744, %v957
        %959 = vmatprep.mubr.bf16.mxu0 %v700
        %960 = vmatmul.mubr.bf16.gmra.mrb[0].mxu0 %v699
        %v961 = vpop.f32.mrb[0].mxu0
        %v962 = vadd.f32 %v740, %v961
        %v963 = vpop.f32.mrb[0].mxu0
        %v964 = vadd.f32 %v744, %v963
        %v965 = vpop.f32.mrb[0].mxu0
        %v966 = vadd.f32 %v740, %v965
        %v967 = vpop.f32.mrb[0].mxu0
        %v968 = vadd.f32 %v744, %v967
        %969 = vmatprep.mubr.bf16.mxu0 %v702
        %970 = vmatmul.mubr.bf16.gmra.mrb[0].mxu0 %v701
        %v971 = vpop.f32.mrb[0].mxu0
        %v972 = vadd.f32 %v740, %v971
        %v973 = vpop.f32.mrb[0].mxu0
        %v974 = vadd.f32 %v744, %v973
        %v975 = vpop.f32.mrb[0].mxu0
        %v976 = vadd.f32 %v740, %v975
        %v977 = vpop.f32.mrb[0].mxu0
        %v978 = vadd.f32 %v744, %v977
        %979 = vdwg.mxu0
        %v980 = vmul.f32 %v942, 0.125
        %v981 = vmul.f32 %v944, 0.125
        %v982 = vmul.f32 %v946, 0.125
        %v983 = vmul.f32 %v948, 0.125
        %v984 = vmul.f32 %v952, 0.125
        %v985 = vmul.f32 %v954, 0.125
        %v986 = vmul.f32 %v956, 0.125
        %v987 = vmul.f32 %v958, 0.125
        %v988 = vmul.f32 %v962, 0.125
        %v989 = vmul.f32 %v964, 0.125
        %v990 = vmul.f32 %v966, 0.125
        %v991 = vmul.f32 %v968, 0.125
        %v992 = vmul.f32 %v972, 0.125
        %v993 = vmul.f32 %v974, 0.125
        %v994 = vmul.f32 %v976, 0.125
        %v995 = vmul.f32 %v978, 0.125
        %v996 = vpack.c.bf16 %v982, %v980
        %v997 = vpack.c.bf16 %v983, %v981
        %v998 = vpack.c.bf16 %v986, %v984
        %v999 = vpack.c.bf16 %v987, %v985
        %v1000 = vpack.c.bf16 %v990, %v988
        %v1001 = vpack.c.bf16 %v991, %v989
        %v1002 = vpack.c.bf16 %v994, %v992
        %v1003 = vpack.c.bf16 %v995, %v993
        %v1012 = vunpack.c.l.b16 %v996
        %v1013 = vunpack.c.l.b16 %v997
        %v1014 = vunpack.c.h.b16 %v996
        %v1015 = vunpack.c.h.b16 %v997
        %v1016 = vunpack.c.l.b16 %v998
        %v1017 = vunpack.c.l.b16 %v999
        %v1018 = vunpack.c.h.b16 %v998
        %v1019 = vunpack.c.h.b16 %v999
        %v1020 = vunpack.c.l.b16 %v1000
        %v1021 = vunpack.c.l.b16 %v1001
        %v1022 = vunpack.c.h.b16 %v1000
        %v1023 = vunpack.c.h.b16 %v1001
        %v1024 = vunpack.c.l.b16 %v1002
        %v1025 = vunpack.c.l.b16 %v1003
        %v1026 = vunpack.c.h.b16 %v1002
        %v1027 = vunpack.c.h.b16 %v1003
        %v1028 = vpack.c.b16 %v1013, %v1012
        %v1029 = vpack.c.b16 %v1015, %v1014
        %v1030 = vpack.c.b16 %v1017, %v1016
        %v1031 = vpack.c.b16 %v1019, %v1018
        %v1032 = vpack.c.b16 %v1021, %v1020
        %v1033 = vpack.c.b16 %v1023, %v1022
        %v1034 = vpack.c.b16 %v1025, %v1024
        %v1035 = vpack.c.b16 %v1027, %v1026
        %1044 = vst [vmem:[%s475] sm:$0xff] %v1028
        %1045 = vst [vmem:[%s475 + $0x8] sm:$0xff] %v1029
        %1046 = vst [vmem:[%s475 + $0x10] sm:$0xff] %v1030
        %1047 = vst [vmem:[%s475 + $0x18] sm:$0xff] %v1031
        %1048 = vst [vmem:[%s475 + $0x20] sm:$0xff] %v1032
        %1049 = vst [vmem:[%s475 + $0x28] sm:$0xff] %v1033
        %1050 = vst [vmem:[%s475 + $0x30] sm:$0xff] %v1034
        %1051 = vst [vmem:[%s475 + $0x38] sm:$0xff] %v1035
        %v1052 = vld [vmem:[#allocation7] sm:$0xff]
        %v1053 = vld [vmem:[#allocation7 + $0x8] sm:$0xff]
        %v1054 = vld [vmem:[#allocation7 + $0x10] sm:$0xff]
        %v1055 = vld [vmem:[#allocation7 + $0x18] sm:$0xff]
        %v1056 = vld [vmem:[#allocation7 + $0x20] sm:$0xff]
        %v1057 = vld [vmem:[#allocation7 + $0x28] sm:$0xff]
        %v1058 = vld [vmem:[#allocation7 + $0x30] sm:$0xff]
        %v1059 = vld [vmem:[#allocation7 + $0x38] sm:$0xff]
        %v1060 = vld [vmem:[#allocation7 + $0x40] sm:$0xff]
        %v1061 = vld [vmem:[#allocation7 + $0x48] sm:$0xff]
        %v1062 = vld [vmem:[#allocation7 + $0x50] sm:$0xff]
        %v1063 = vld [vmem:[#allocation7 + $0x58] sm:$0xff]
        %v1064 = vld [vmem:[#allocation7 + $0x60] sm:$0xff]
        %v1065 = vld [vmem:[#allocation7 + $0x68] sm:$0xff]
        %v1066 = vld [vmem:[#allocation7 + $0x70] sm:$0xff]
        %v1067 = vld [vmem:[#allocation7 + $0x78] sm:$0xff]
        %v1068 = vld [vmem:[#allocation7 + $0x80] sm:$0xff]
        %v1069 = vld [vmem:[#allocation7 + $0x88] sm:$0xff]
        %v1070 = vld [vmem:[#allocation7 + $0x90] sm:$0xff]
        %v1071 = vld [vmem:[#allocation7 + $0x98] sm:$0xff]
        %v1072 = vld [vmem:[#allocation7 + $0xa0] sm:$0xff]
        %v1073 = vld [vmem:[#allocation7 + $0xa8] sm:$0xff]
        %v1074 = vld [vmem:[#allocation7 + $0xb0] sm:$0xff]
        %v1075 = vld [vmem:[#allocation7 + $0xb8] sm:$0xff]
        %v1076 = vld [vmem:[#allocation7 + $0xc0] sm:$0xff]
        %v1077 = vld [vmem:[#allocation7 + $0xc8] sm:$0xff]
        %v1078 = vld [vmem:[#allocation7 + $0xd0] sm:$0xff]
        %v1079 = vld [vmem:[#allocation7 + $0xd8] sm:$0xff]
        %v1080 = vld [vmem:[#allocation7 + $0xe0] sm:$0xff]
        %v1081 = vld [vmem:[#allocation7 + $0xe8] sm:$0xff]
        %v1082 = vld [vmem:[#allocation7 + $0xf0] sm:$0xff]
        %v1083 = vld [vmem:[#allocation7 + $0xf8] sm:$0xff]
        %v1084 = vld [vmem:[%s7] sm:$0x3]
        %v1086 = vlaneseq
        %v1087 = vshrl.u32 %v1086, 7
        %v1088 = vsub.s32 0, %v1087
        %v1089 = vrot.slane %v1084, %v1088
        %v1090 = vlaneseq
        %v1091 = vshrl.u32 %v1090, 7
        %v1092 = vsub.s32 1, %v1091
        %v1093 = vrot.slane %v1084, %v1092
        %v1128 = vunpack.c.l.b16 %v1052
        %v1129 = vunpack.c.h.b16 %v1052
        %v1130 = vunpack.c.l.b16 %v1053
        %v1131 = vunpack.c.h.b16 %v1053
        %v1132 = vunpack.c.l.b16 %v1054
        %v1133 = vunpack.c.h.b16 %v1054
        %v1134 = vunpack.c.l.b16 %v1055
        %v1135 = vunpack.c.h.b16 %v1055
        %v1136 = vunpack.c.l.b16 %v1056
        %v1137 = vunpack.c.h.b16 %v1056
        %v1138 = vunpack.c.l.b16 %v1057
        %v1139 = vunpack.c.h.b16 %v1057
        %v1140 = vunpack.c.l.b16 %v1058
        %v1141 = vunpack.c.h.b16 %v1058
        %v1142 = vunpack.c.l.b16 %v1059
        %v1143 = vunpack.c.h.b16 %v1059
        %v1144 = vunpack.c.l.b16 %v1060
        %v1145 = vunpack.c.h.b16 %v1060
        %v1146 = vunpack.c.l.b16 %v1061
        %v1147 = vunpack.c.h.b16 %v1061
        %v1148 = vunpack.c.l.b16 %v1062
        %v1149 = vunpack.c.h.b16 %v1062
        %v1150 = vunpack.c.l.b16 %v1063
        %v1151 = vunpack.c.h.b16 %v1063
        %v1152 = vunpack.c.l.b16 %v1064
        %v1153 = vunpack.c.h.b16 %v1064
        %v1154 = vunpack.c.l.b16 %v1065
        %v1155 = vunpack.c.h.b16 %v1065
        %v1156 = vunpack.c.l.b16 %v1066
        %v1157 = vunpack.c.h.b16 %v1066
        %v1158 = vunpack.c.l.b16 %v1067
        %v1159 = vunpack.c.h.b16 %v1067
        %v1160 = vunpack.c.l.b16 %v1068
        %v1161 = vunpack.c.h.b16 %v1068
        %v1162 = vunpack.c.l.b16 %v1069
        %v1163 = vunpack.c.h.b16 %v1069
        %v1164 = vunpack.c.l.b16 %v1070
        %v1165 = vunpack.c.h.b16 %v1070
        %v1166 = vunpack.c.l.b16 %v1071
        %v1167 = vunpack.c.h.b16 %v1071
        %v1168 = vunpack.c.l.b16 %v1072
        %v1169 = vunpack.c.h.b16 %v1072
        %v1170 = vunpack.c.l.b16 %v1073
        %v1171 = vunpack.c.h.b16 %v1073
        %v1172 = vunpack.c.l.b16 %v1074
        %v1173 = vunpack.c.h.b16 %v1074
        %v1174 = vunpack.c.l.b16 %v1075
        %v1175 = vunpack.c.h.b16 %v1075
        %v1176 = vunpack.c.l.b16 %v1076
        %v1177 = vunpack.c.h.b16 %v1076
        %v1178 = vunpack.c.l.b16 %v1077
        %v1179 = vunpack.c.h.b16 %v1077
        %v1180 = vunpack.c.l.b16 %v1078
        %v1181 = vunpack.c.h.b16 %v1078
        %v1182 = vunpack.c.l.b16 %v1079
        %v1183 = vunpack.c.h.b16 %v1079
        %v1184 = vunpack.c.l.b16 %v1080
        %v1185 = vunpack.c.h.b16 %v1080
        %v1186 = vunpack.c.l.b16 %v1081
        %v1187 = vunpack.c.h.b16 %v1081
        %v1188 = vunpack.c.l.b16 %v1082
        %v1189 = vunpack.c.h.b16 %v1082
        %v1190 = vunpack.c.l.b16 %v1083
        %v1191 = vunpack.c.h.b16 %v1083
        %v1192 = vpack.c.b16 %v1130, %v1128
        %v1193 = vpack.c.b16 %v1131, %v1129
        %v1194 = vpack.c.b16 %v1134, %v1132
        %v1195 = vpack.c.b16 %v1135, %v1133
        %v1196 = vpack.c.b16 %v1138, %v1136
        %v1197 = vpack.c.b16 %v1139, %v1137
        %v1198 = vpack.c.b16 %v1142, %v1140
        %v1199 = vpack.c.b16 %v1143, %v1141
        %v1200 = vpack.c.b16 %v1146, %v1144
        %v1201 = vpack.c.b16 %v1147, %v1145
        %v1202 = vpack.c.b16 %v1150, %v1148
        %v1203 = vpack.c.b16 %v1151, %v1149
        %v1204 = vpack.c.b16 %v1154, %v1152
        %v1205 = vpack.c.b16 %v1155, %v1153
        %v1206 = vpack.c.b16 %v1158, %v1156
        %v1207 = vpack.c.b16 %v1159, %v1157
        %v1208 = vpack.c.b16 %v1162, %v1160
        %v1209 = vpack.c.b16 %v1163, %v1161
        %v1210 = vpack.c.b16 %v1166, %v1164
        %v1211 = vpack.c.b16 %v1167, %v1165
        %v1212 = vpack.c.b16 %v1170, %v1168
        %v1213 = vpack.c.b16 %v1171, %v1169
        %v1214 = vpack.c.b16 %v1174, %v1172
        %v1215 = vpack.c.b16 %v1175, %v1173
        %v1216 = vpack.c.b16 %v1178, %v1176
        %v1217 = vpack.c.b16 %v1179, %v1177
        %v1218 = vpack.c.b16 %v1182, %v1180
        %v1219 = vpack.c.b16 %v1183, %v1181
        %v1220 = vpack.c.b16 %v1186, %v1184
        %v1221 = vpack.c.b16 %v1187, %v1185
        %v1222 = vpack.c.b16 %v1190, %v1188
        %v1223 = vpack.c.b16 %v1191, %v1189
        %1256 = vmatprep.subr.bf16.mxu0 %v1193
        %1257 = vmatpush1.bf16.msra.mxu0 %v1192
        %1258 = vmatprep.subr.bf16.mxu0 %v1195
        %1259 = vmatpush1.bf16.msra.mxu0 %v1194
        %1260 = vmatprep.subr.bf16.mxu0 %v1197
        %1261 = vmatpush1.bf16.msra.mxu0 %v1196
        %1262 = vmatprep.subr.bf16.mxu0 %v1199
        %1263 = vmatpush1.bf16.msra.mxu0 %v1198
        %1264 = vmatprep.subr.bf16.mxu0 %v1201
        %1265 = vmatpush1.bf16.msra.mxu0 %v1200
        %1266 = vmatprep.subr.bf16.mxu0 %v1203
        %1267 = vmatpush1.bf16.msra.mxu0 %v1202
        %1268 = vmatprep.subr.bf16.mxu0 %v1205
        %1269 = vmatpush1.bf16.msra.mxu0 %v1204
        %1270 = vmatprep.subr.bf16.mxu0 %v1207
        %1271 = vmatpush1.bf16.msra.mxu0 %v1206
        %1272 = vmatprep.subr.bf16.mxu0 %v1209
        %1273 = vmatpush1.bf16.msra.mxu0 %v1208
        %1274 = vmatprep.subr.bf16.mxu0 %v1211
        %1275 = vmatpush1.bf16.msra.mxu0 %v1210
        %1276 = vmatprep.subr.bf16.mxu0 %v1213
        %1277 = vmatpush1.bf16.msra.mxu0 %v1212
        %1278 = vmatprep.subr.bf16.mxu0 %v1215
        %1279 = vmatpush1.bf16.msra.mxu0 %v1214
        %1280 = vmatprep.subr.bf16.mxu0 %v1217
        %1281 = vmatpush1.bf16.msra.mxu0 %v1216
        %1282 = vmatprep.subr.bf16.mxu0 %v1219
        %1283 = vmatpush1.bf16.msra.mxu0 %v1218
        %1284 = vmatprep.subr.bf16.mxu0 %v1221
        %1285 = vmatpush1.bf16.msra.mxu0 %v1220
        %1286 = vmatprep.subr.bf16.mxu0 %v1223
        %1287 = vmatpush1.bf16.msra.mxu0 %v1222
        %1288 = vmatprep.mubr.bf16.mxu0 %v696
        %1289 = vmatmul.mubr.bf16.gmra.mrb[0].mxu0 %v695
        %v1290 = vpop.f32.mrb[0].mxu0
        %v1291 = vadd.f32 %v1089, %v1290
        %v1292 = vpop.f32.mrb[0].mxu0
        %v1293 = vadd.f32 %v1093, %v1292
        %v1294 = vpop.f32.mrb[0].mxu0
        %v1295 = vadd.f32 %v1089, %v1294
        %v1296 = vpop.f32.mrb[0].mxu0
        %v1297 = vadd.f32 %v1093, %v1296
        %1298 = vmatprep.mubr.bf16.mxu0 %v698
        %1299 = vmatmul.mubr.bf16.gmra.mrb[0].mxu0 %v697
        %v1300 = vpop.f32.mrb[0].mxu0
        %v1301 = vadd.f32 %v1089, %v1300
        %v1302 = vpop.f32.mrb[0].mxu0
        %v1303 = vadd.f32 %v1093, %v1302
        %v1304 = vpop.f32.mrb[0].mxu0
        %v1305 = vadd.f32 %v1089, %v1304
        %v1306 = vpop.f32.mrb[0].mxu0
        %v1307 = vadd.f32 %v1093, %v1306
        %1308 = vmatprep.mubr.bf16.mxu0 %v700
        %1309 = vmatmul.mubr.bf16.gmra.mrb[0].mxu0 %v699
        %v1310 = vpop.f32.mrb[0].mxu0
        %v1311 = vadd.f32 %v1089, %v1310
        %v1312 = vpop.f32.mrb[0].mxu0
        %v1313 = vadd.f32 %v1093, %v1312
        %v1314 = vpop.f32.mrb[0].mxu0
        %v1315 = vadd.f32 %v1089, %v1314
        %v1316 = vpop.f32.mrb[0].mxu0
        %v1317 = vadd.f32 %v1093, %v1316
        %1318 = vmatprep.mubr.bf16.mxu0 %v702
        %1319 = vmatmul.mubr.bf16.gmra.mrb[0].mxu0 %v701
        %v1320 = vpop.f32.mrb[0].mxu0
        %v1321 = vadd.f32 %v1089, %v1320
        %v1322 = vpop.f32.mrb[0].mxu0
        %v1323 = vadd.f32 %v1093, %v1322
        %v1324 = vpop.f32.mrb[0].mxu0
        %v1325 = vadd.f32 %v1089, %v1324
        %v1326 = vpop.f32.mrb[0].mxu0
        %v1327 = vadd.f32 %v1093, %v1326
        %1328 = vdwg.mxu0
        %v1329 = vpack.c.bf16 %v1295, %v1291
        %v1330 = vpack.c.bf16 %v1297, %v1293
        %v1331 = vpack.c.bf16 %v1305, %v1301
        %v1332 = vpack.c.bf16 %v1307, %v1303
        %v1333 = vpack.c.bf16 %v1315, %v1311
        %v1334 = vpack.c.bf16 %v1317, %v1313
        %v1335 = vpack.c.bf16 %v1325, %v1321
        %v1336 = vpack.c.bf16 %v1327, %v1323
        %v1345 = vunpack.c.l.b16 %v1329
        %v1346 = vunpack.c.l.b16 %v1330
        %v1347 = vunpack.c.h.b16 %v1329
        %v1348 = vunpack.c.h.b16 %v1330
        %v1349 = vunpack.c.l.b16 %v1331
        %v1350 = vunpack.c.l.b16 %v1332
        %v1351 = vunpack.c.h.b16 %v1331
        %v1352 = vunpack.c.h.b16 %v1332
        %v1353 = vunpack.c.l.b16 %v1333
        %v1354 = vunpack.c.l.b16 %v1334
        %v1355 = vunpack.c.h.b16 %v1333
        %v1356 = vunpack.c.h.b16 %v1334
        %v1357 = vunpack.c.l.b16 %v1335
        %v1358 = vunpack.c.l.b16 %v1336
        %v1359 = vunpack.c.h.b16 %v1335
        %v1360 = vunpack.c.h.b16 %v1336
        %v1361 = vpack.c.b16 %v1346, %v1345
        %v1362 = vpack.c.b16 %v1348, %v1347
        %v1363 = vpack.c.b16 %v1350, %v1349
        %v1364 = vpack.c.b16 %v1352, %v1351
        %v1365 = vpack.c.b16 %v1354, %v1353
        %v1366 = vpack.c.b16 %v1356, %v1355
        %v1367 = vpack.c.b16 %v1358, %v1357
        %v1368 = vpack.c.b16 %v1360, %v1359
        %1377 = vst [vmem:[%s482] sm:$0xff] %v1361
        %1378 = vst [vmem:[%s482 + $0x8] sm:$0xff] %v1362
        %1379 = vst [vmem:[%s482 + $0x10] sm:$0xff] %v1363
        %1380 = vst [vmem:[%s482 + $0x18] sm:$0xff] %v1364
        %1381 = vst [vmem:[%s482 + $0x20] sm:$0xff] %v1365
        %1382 = vst [vmem:[%s482 + $0x28] sm:$0xff] %v1366
        %1383 = vst [vmem:[%s482 + $0x30] sm:$0xff] %v1367
        %1384 = vst [vmem:[%s482 + $0x38] sm:$0xff] %v1368
        %v1385 = vld [vmem:[#allocation8] sm:$0xff]
        %v1386 = vld [vmem:[#allocation8 + $0x8] sm:$0xff]
        %v1387 = vld [vmem:[#allocation8 + $0x10] sm:$0xff]
        %v1388 = vld [vmem:[#allocation8 + $0x18] sm:$0xff]
        %v1389 = vld [vmem:[#allocation8 + $0x20] sm:$0xff]
        %v1390 = vld [vmem:[#allocation8 + $0x28] sm:$0xff]
        %v1391 = vld [vmem:[#allocation8 + $0x30] sm:$0xff]
        %v1392 = vld [vmem:[#allocation8 + $0x38] sm:$0xff]
        %v1393 = vld [vmem:[#allocation8 + $0x40] sm:$0xff]
        %v1394 = vld [vmem:[#allocation8 + $0x48] sm:$0xff]
        %v1395 = vld [vmem:[#allocation8 + $0x50] sm:$0xff]
        %v1396 = vld [vmem:[#allocation8 + $0x58] sm:$0xff]
        %v1397 = vld [vmem:[#allocation8 + $0x60] sm:$0xff]
        %v1398 = vld [vmem:[#allocation8 + $0x68] sm:$0xff]
        %v1399 = vld [vmem:[#allocation8 + $0x70] sm:$0xff]
        %v1400 = vld [vmem:[#allocation8 + $0x78] sm:$0xff]
        %v1401 = vld [vmem:[#allocation8 + $0x80] sm:$0xff]
        %v1402 = vld [vmem:[#allocation8 + $0x88] sm:$0xff]
        %v1403 = vld [vmem:[#allocation8 + $0x90] sm:$0xff]
        %v1404 = vld [vmem:[#allocation8 + $0x98] sm:$0xff]
        %v1405 = vld [vmem:[#allocation8 + $0xa0] sm:$0xff]
        %v1406 = vld [vmem:[#allocation8 + $0xa8] sm:$0xff]
        %v1407 = vld [vmem:[#allocation8 + $0xb0] sm:$0xff]
        %v1408 = vld [vmem:[#allocation8 + $0xb8] sm:$0xff]
        %v1409 = vld [vmem:[#allocation8 + $0xc0] sm:$0xff]
        %v1410 = vld [vmem:[#allocation8 + $0xc8] sm:$0xff]
        %v1411 = vld [vmem:[#allocation8 + $0xd0] sm:$0xff]
        %v1412 = vld [vmem:[#allocation8 + $0xd8] sm:$0xff]
        %v1413 = vld [vmem:[#allocation8 + $0xe0] sm:$0xff]
        %v1414 = vld [vmem:[#allocation8 + $0xe8] sm:$0xff]
        %v1415 = vld [vmem:[#allocation8 + $0xf0] sm:$0xff]
        %v1416 = vld [vmem:[#allocation8 + $0xf8] sm:$0xff]
        %v1417 = vld [vmem:[%s8] sm:$0x3]
        %v1419 = vlaneseq
        %v1420 = vshrl.u32 %v1419, 7
        %v1421 = vsub.s32 0, %v1420
        %v1422 = vrot.slane %v1417, %v1421
        %v1423 = vlaneseq
        %v1424 = vshrl.u32 %v1423, 7
        %v1425 = vsub.s32 1, %v1424
        %v1426 = vrot.slane %v1417, %v1425
        %v1461 = vunpack.c.l.b16 %v1385
        %v1462 = vunpack.c.h.b16 %v1385
        %v1463 = vunpack.c.l.b16 %v1386
        %v1464 = vunpack.c.h.b16 %v1386
        %v1465 = vunpack.c.l.b16 %v1387
        %v1466 = vunpack.c.h.b16 %v1387
        %v1467 = vunpack.c.l.b16 %v1388
        %v1468 = vunpack.c.h.b16 %v1388
        %v1469 = vunpack.c.l.b16 %v1389
        %v1470 = vunpack.c.h.b16 %v1389
        %v1471 = vunpack.c.l.b16 %v1390
        %v1472 = vunpack.c.h.b16 %v1390
        %v1473 = vunpack.c.l.b16 %v1391
        %v1474 = vunpack.c.h.b16 %v1391
        %v1475 = vunpack.c.l.b16 %v1392
        %v1476 = vunpack.c.h.b16 %v1392
        %v1477 = vunpack.c.l.b16 %v1393
        %v1478 = vunpack.c.h.b16 %v1393
        %v1479 = vunpack.c.l.b16 %v1394
        %v1480 = vunpack.c.h.b16 %v1394
        %v1481 = vunpack.c.l.b16 %v1395
        %v1482 = vunpack.c.h.b16 %v1395
        %v1483 = vunpack.c.l.b16 %v1396
        %v1484 = vunpack.c.h.b16 %v1396
        %v1485 = vunpack.c.l.b16 %v1397
        %v1486 = vunpack.c.h.b16 %v1397
        %v1487 = vunpack.c.l.b16 %v1398
        %v1488 = vunpack.c.h.b16 %v1398
        %v1489 = vunpack.c.l.b16 %v1399
        %v1490 = vunpack.c.h.b16 %v1399
        %v1491 = vunpack.c.l.b16 %v1400
        %v1492 = vunpack.c.h.b16 %v1400
        %v1493 = vunpack.c.l.b16 %v1401
        %v1494 = vunpack.c.h.b16 %v1401
        %v1495 = vunpack.c.l.b16 %v1402
        %v1496 = vunpack.c.h.b16 %v1402
        %v1497 = vunpack.c.l.b16 %v1403
        %v1498 = vunpack.c.h.b16 %v1403
        %v1499 = vunpack.c.l.b16 %v1404
        %v1500 = vunpack.c.h.b16 %v1404
        %v1501 = vunpack.c.l.b16 %v1405
        %v1502 = vunpack.c.h.b16 %v1405
        %v1503 = vunpack.c.l.b16 %v1406
        %v1504 = vunpack.c.h.b16 %v1406
        %v1505 = vunpack.c.l.b16 %v1407
        %v1506 = vunpack.c.h.b16 %v1407
        %v1507 = vunpack.c.l.b16 %v1408
        %v1508 = vunpack.c.h.b16 %v1408
        %v1509 = vunpack.c.l.b16 %v1409
        %v1510 = vunpack.c.h.b16 %v1409
        %v1511 = vunpack.c.l.b16 %v1410
        %v1512 = vunpack.c.h.b16 %v1410
        %v1513 = vunpack.c.l.b16 %v1411
        %v1514 = vunpack.c.h.b16 %v1411
        %v1515 = vunpack.c.l.b16 %v1412
        %v1516 = vunpack.c.h.b16 %v1412
        %v1517 = vunpack.c.l.b16 %v1413
        %v1518 = vunpack.c.h.b16 %v1413
        %v1519 = vunpack.c.l.b16 %v1414
        %v1520 = vunpack.c.h.b16 %v1414
        %v1521 = vunpack.c.l.b16 %v1415
        %v1522 = vunpack.c.h.b16 %v1415
        %v1523 = vunpack.c.l.b16 %v1416
        %v1524 = vunpack.c.h.b16 %v1416
        %v1525 = vpack.c.b16 %v1463, %v1461
        %v1526 = vpack.c.b16 %v1464, %v1462
        %v1527 = vpack.c.b16 %v1467, %v1465
        %v1528 = vpack.c.b16 %v1468, %v1466
        %v1529 = vpack.c.b16 %v1471, %v1469
        %v1530 = vpack.c.b16 %v1472, %v1470
        %v1531 = vpack.c.b16 %v1475, %v1473
        %v1532 = vpack.c.b16 %v1476, %v1474
        %v1533 = vpack.c.b16 %v1479, %v1477
        %v1534 = vpack.c.b16 %v1480, %v1478
        %v1535 = vpack.c.b16 %v1483, %v1481
        %v1536 = vpack.c.b16 %v1484, %v1482
        %v1537 = vpack.c.b16 %v1487, %v1485
        %v1538 = vpack.c.b16 %v1488, %v1486
        %v1539 = vpack.c.b16 %v1491, %v1489
        %v1540 = vpack.c.b16 %v1492, %v1490
        %v1541 = vpack.c.b16 %v1495, %v1493
        %v1542 = vpack.c.b16 %v1496, %v1494
        %v1543 = vpack.c.b16 %v1499, %v1497
        %v1544 = vpack.c.b16 %v1500, %v1498
        %v1545 = vpack.c.b16 %v1503, %v1501
        %v1546 = vpack.c.b16 %v1504, %v1502
        %v1547 = vpack.c.b16 %v1507, %v1505
        %v1548 = vpack.c.b16 %v1508, %v1506
        %v1549 = vpack.c.b16 %v1511, %v1509
        %v1550 = vpack.c.b16 %v1512, %v1510
        %v1551 = vpack.c.b16 %v1515, %v1513
        %v1552 = vpack.c.b16 %v1516, %v1514
        %v1553 = vpack.c.b16 %v1519, %v1517
        %v1554 = vpack.c.b16 %v1520, %v1518
        %v1555 = vpack.c.b16 %v1523, %v1521
        %v1556 = vpack.c.b16 %v1524, %v1522
        %1589 = vmatprep.subr.bf16.mxu0 %v1526
        %1590 = vmatpush1.bf16.msra.mxu0 %v1525
        %1591 = vmatprep.subr.bf16.mxu0 %v1528
        %1592 = vmatpush1.bf16.msra.mxu0 %v1527
        %1593 = vmatprep.subr.bf16.mxu0 %v1530
        %1594 = vmatpush1.bf16.msra.mxu0 %v1529
        %1595 = vmatprep.subr.bf16.mxu0 %v1532
        %1596 = vmatpush1.bf16.msra.mxu0 %v1531
        %1597 = vmatprep.subr.bf16.mxu0 %v1534
        %1598 = vmatpush1.bf16.msra.mxu0 %v1533
        %1599 = vmatprep.subr.bf16.mxu0 %v1536
        %1600 = vmatpush1.bf16.msra.mxu0 %v1535
        %1601 = vmatprep.subr.bf16.mxu0 %v1538
        %1602 = vmatpush1.bf16.msra.mxu0 %v1537
        %1603 = vmatprep.subr.bf16.mxu0 %v1540
        %1604 = vmatpush1.bf16.msra.mxu0 %v1539
        %1605 = vmatprep.subr.bf16.mxu0 %v1542
        %1606 = vmatpush1.bf16.msra.mxu0 %v1541
        %1607 = vmatprep.subr.bf16.mxu0 %v1544
        %1608 = vmatpush1.bf16.msra.mxu0 %v1543
        %1609 = vmatprep.subr.bf16.mxu0 %v1546
        %1610 = vmatpush1.bf16.msra.mxu0 %v1545
        %1611 = vmatprep.subr.bf16.mxu0 %v1548
        %1612 = vmatpush1.bf16.msra.mxu0 %v1547
        %1613 = vmatprep.subr.bf16.mxu0 %v1550
        %1614 = vmatpush1.bf16.msra.mxu0 %v1549
        %1615 = vmatprep.subr.bf16.mxu0 %v1552
        %1616 = vmatpush1.bf16.msra.mxu0 %v1551
        %1617 = vmatprep.subr.bf16.mxu0 %v1554
        %1618 = vmatpush1.bf16.msra.mxu0 %v1553
        %1619 = vmatprep.subr.bf16.mxu0 %v1556
        %1620 = vmatpush1.bf16.msra.mxu0 %v1555
        %1621 = vmatprep.mubr.bf16.mxu0 %v696
        %1622 = vmatmul.mubr.bf16.gmra.mrb[0].mxu0 %v695
        %v1623 = vpop.f32.mrb[0].mxu0
        %v1624 = vadd.f32 %v1422, %v1623
        %v1625 = vpop.f32.mrb[0].mxu0
        %v1626 = vadd.f32 %v1426, %v1625
        %v1627 = vpop.f32.mrb[0].mxu0
        %v1628 = vadd.f32 %v1422, %v1627
        %v1629 = vpop.f32.mrb[0].mxu0
        %v1630 = vadd.f32 %v1426, %v1629
        %1631 = vmatprep.mubr.bf16.mxu0 %v698
        %1632 = vmatmul.mubr.bf16.gmra.mrb[0].mxu0 %v697
        %v1633 = vpop.f32.mrb[0].mxu0
        %v1634 = vadd.f32 %v1422, %v1633
        %v1635 = vpop.f32.mrb[0].mxu0
        %v1636 = vadd.f32 %v1426, %v1635
        %v1637 = vpop.f32.mrb[0].mxu0
        %v1638 = vadd.f32 %v1422, %v1637
        %v1639 = vpop.f32.mrb[0].mxu0
        %v1640 = vadd.f32 %v1426, %v1639
        %1641 = vmatprep.mubr.bf16.mxu0 %v700
        %1642 = vmatmul.mubr.bf16.gmra.mrb[0].mxu0 %v699
        %v1643 = vpop.f32.mrb[0].mxu0
        %v1644 = vadd.f32 %v1422, %v1643
        %v1645 = vpop.f32.mrb[0].mxu0
        %v1646 = vadd.f32 %v1426, %v1645
        %v1647 = vpop.f32.mrb[0].mxu0
        %v1648 = vadd.f32 %v1422, %v1647
        %v1649 = vpop.f32.mrb[0].mxu0
        %v1650 = vadd.f32 %v1426, %v1649
        %1651 = vmatprep.mubr.bf16.mxu0 %v702
        %1652 = vmatmul.mubr.bf16.gmra.mrb[0].mxu0 %v701
        %v1653 = vpop.f32.mrb[0].mxu0
        %v1654 = vadd.f32 %v1422, %v1653
        %v1655 = vpop.f32.mrb[0].mxu0
        %v1656 = vadd.f32 %v1426, %v1655
        %v1657 = vpop.f32.mrb[0].mxu0
        %v1658 = vadd.f32 %v1422, %v1657
        %v1659 = vpop.f32.mrb[0].mxu0
        %v1660 = vadd.f32 %v1426, %v1659
        %1661 = vdwg.mxu0
        %v1662 = vpack.c.bf16 %v1628, %v1624
        %v1663 = vpack.c.bf16 %v1630, %v1626
        %v1664 = vpack.c.bf16 %v1638, %v1634
        %v1665 = vpack.c.bf16 %v1640, %v1636
        %v1666 = vpack.c.bf16 %v1648, %v1644
        %v1667 = vpack.c.bf16 %v1650, %v1646
        %v1668 = vpack.c.bf16 %v1658, %v1654
        %v1669 = vpack.c.bf16 %v1660, %v1656
        %v1678 = vunpack.c.l.b16 %v1662
        %v1679 = vunpack.c.l.b16 %v1663
        %v1680 = vunpack.c.h.b16 %v1662
        %v1681 = vunpack.c.h.b16 %v1663
        %v1682 = vunpack.c.l.b16 %v1664
        %v1683 = vunpack.c.l.b16 %v1665
        %v1684 = vunpack.c.h.b16 %v1664
        %v1685 = vunpack.c.h.b16 %v1665
        %v1686 = vunpack.c.l.b16 %v1666
        %v1687 = vunpack.c.l.b16 %v1667
        %v1688 = vunpack.c.h.b16 %v1666
        %v1689 = vunpack.c.h.b16 %v1667
        %v1690 = vunpack.c.l.b16 %v1668
        %v1691 = vunpack.c.l.b16 %v1669
        %v1692 = vunpack.c.h.b16 %v1668
        %v1693 = vunpack.c.h.b16 %v1669
        %v1694 = vpack.c.b16 %v1679, %v1678
        %v1695 = vpack.c.b16 %v1681, %v1680
        %v1696 = vpack.c.b16 %v1683, %v1682
        %v1697 = vpack.c.b16 %v1685, %v1684
        %v1698 = vpack.c.b16 %v1687, %v1686
        %v1699 = vpack.c.b16 %v1689, %v1688
        %v1700 = vpack.c.b16 %v1691, %v1690
        %v1701 = vpack.c.b16 %v1693, %v1692
        %1710 = vst [vmem:[%s489] sm:$0xff] %v1694
        %1711 = vst [vmem:[%s489 + $0x8] sm:$0xff] %v1695
        %1712 = vst [vmem:[%s489 + $0x10] sm:$0xff] %v1696
        %1713 = vst [vmem:[%s489 + $0x18] sm:$0xff] %v1697
        %1714 = vst [vmem:[%s489 + $0x20] sm:$0xff] %v1698
        %1715 = vst [vmem:[%s489 + $0x28] sm:$0xff] %v1699
        %1716 = vst [vmem:[%s489 + $0x30] sm:$0xff] %v1700
        %1717 = vst [vmem:[%s489 + $0x38] sm:$0xff] %v1701
        %s1718 = sand.u32 %s252, 1
        %s1719 = scalar_lea.sflag [#allocation4], %s1718
        %s1720 = sand.u32 %s252, 1
        %s1721 = smul.addr %s1720, 64
        %s1722 = scalar_lea.vmem [#allocation10], %s1721
        %s1723 = sand.u32 %s34, 1
        %s1724 = scalar_lea.sflag [#allocation12], %s1723
        %s1725 = sand.u32 %s280, 1
        %s1726 = smul.addr %s1725, 64
        %s1727 = scalar_lea.vmem [#allocation11], %s1726
        %s1728 = sand.u32 %s34, 1
        %s1729 = scalar_lea.sflag [#allocation12], %s1728
        %s1730 = sand.u32 %s308, 1
        %s1731 = smul.addr %s1730, 64
        %s1732 = scalar_lea.vmem [#allocation13], %s1731
        // Predicated region
        $region73: #{tpu_custom_call.1} parent=55 // pred_check
          %p1733 = pneg %p262
        $region74: #{tpu_custom_call.1} parent=55 // pred_check_branch
          %1735 = sbr.rel (%p1733) target = $region76
        $region75: #{tpu_custom_call.1} parent=55 // pred_region
          %s1736 = smul.u32 8, %s39
          %s1738 = ssub.s32 1024, 1024
          %1739 = vsyncadd %s1719, %s1738
          %s1740 = smul.addr %s1736, 2
          %s1741 = smul.addr %s38, 16
          %s1742 = sadd.s32 %s1740, %s1741
          %s1743 = smul.addr %s1742, 64
          %s1744 = scalar_lea.hbm %s9, %s1743
          %s1745 = sshll.u32 %s1722, 4
          %s1746 = int_to_ptr.vmem [resolvable:$true] %s1745
          %1751 = dma.vmem_to_hbm [thread:$0]  %s1746, 1024, %s1744, %s1719, 128, 128, 8
        $region76: #{tpu_custom_call.1} parent=55 // pred_fallthru
          _
        // Predicated region
        $region77: #{tpu_custom_call.1} parent=55 // pred_check
          %p1752 = pneg %p290
        $region78: #{tpu_custom_call.1} parent=55 // pred_check_branch
          %1754 = sbr.rel (%p1752) target = $region80
        $region79: #{tpu_custom_call.1} parent=55 // pred_region
          %s1755 = smul.u32 8, %s39
          %s1757 = ssub.s32 1024, 1024
          %1758 = vsyncadd %s1724, %s1757
          %s1759 = smul.addr %s1755, 2
          %s1760 = smul.addr %s38, 16
          %s1761 = sadd.s32 %s1759, %s1760
          %s1762 = smul.addr %s1761, 64
          %s1763 = scalar_lea.hbm %s10, %s1762
          %s1764 = sshll.u32 %s1727, 4
          %s1765 = int_to_ptr.vmem [resolvable:$true] %s1764
          %1770 = dma.vmem_to_hbm [thread:$0]  %s1765, 1024, %s1763, %s1724, 128, 128, 8
        $region80: #{tpu_custom_call.1} parent=55 // pred_fallthru
          _
        // Predicated region
        $region81: #{tpu_custom_call.1} parent=55 // pred_check
          %p1771 = pneg %p318
        $region82: #{tpu_custom_call.1} parent=55 // pred_check_branch
          %1773 = sbr.rel (%p1771) target = $region84
        $region83: #{tpu_custom_call.1} parent=55 // pred_region
          %s1774 = smul.u32 8, %s39
          %s1776 = ssub.s32 1024, 1024
          %1777 = vsyncadd %s1729, %s1776
          %s1778 = smul.addr %s1774, 2
          %s1779 = smul.addr %s38, 16
          %s1780 = sadd.s32 %s1778, %s1779
          %s1781 = smul.addr %s1780, 64
          %s1782 = scalar_lea.hbm %s11, %s1781
          %s1783 = sshll.u32 %s1732, 4
          %s1784 = int_to_ptr.vmem [resolvable:$true] %s1783
          %1789 = dma.vmem_to_hbm [thread:$0]  %s1784, 1024, %s1782, %s1729, 128, 128, 8
        $region84: #{tpu_custom_call.1} parent=55 // pred_fallthru
          _
      $region56: #{tpu_custom_call.1} parent=5 // pred_fallthru
        _
      %p1790 = scmp.le.s32.totalorder 2, %s29
      // Predicated region
      $region85: #{tpu_custom_call.1} parent=5 // pred_check
        %p1791 = pneg %p1790
      $region86: #{tpu_custom_call.1} parent=5 // pred_check_branch
        %1793 = sbr.rel (%p1791) target = $region88
      $region87: #{tpu_custom_call.1} parent=5 // pred_region
        %s1794 = ssub.s32 %s29, 2
        // Predicated region
        $region89: #{tpu_custom_call.1} parent=87 // pred_check
          %p1795 = pneg %p268
        $region90: #{tpu_custom_call.1} parent=87 // pred_check_branch
          %1797 = sbr.rel (%p1795) target = $region92
        $region91: #{tpu_custom_call.1} parent=87 // pred_region
          %s1798 = sand.u32 %s253, 1
          %s1799 = scalar_lea.sflag [#allocation4], %s1798
          %s1800 = sand.u32 %s253, 1
          %s1801 = smul.addr %s1800, 64
          %s1802 = scalar_lea.vmem [#allocation10], %s1801
          %1803 = dma.done %s1799, 1024
        $region92: #{tpu_custom_call.1} parent=87 // pred_fallthru
          _
        // Predicated region
        $region93: #{tpu_custom_call.1} parent=87 // pred_check
          %p1804 = pneg %p296
        $region94: #{tpu_custom_call.1} parent=87 // pred_check_branch
          %1806 = sbr.rel (%p1804) target = $region96
        $region95: #{tpu_custom_call.1} parent=87 // pred_region
          %s1807 = sand.u32 %s35, 1
          %s1808 = scalar_lea.sflag [#allocation12], %s1807
          %s1809 = sand.u32 %s281, 1
          %s1810 = smul.addr %s1809, 64
          %s1811 = scalar_lea.vmem [#allocation11], %s1810
          %1812 = dma.done %s1808, 1024
        $region96: #{tpu_custom_call.1} parent=87 // pred_fallthru
          _
        // Predicated region
        $region97: #{tpu_custom_call.1} parent=87 // pred_check
          %p1813 = pneg %p324
        $region98: #{tpu_custom_call.1} parent=87 // pred_check_branch
          %1815 = sbr.rel (%p1813) target = $region100
        $region99: #{tpu_custom_call.1} parent=87 // pred_region
          %s1816 = sand.u32 %s35, 1
          %s1817 = scalar_lea.sflag [#allocation12], %s1816
          %s1818 = sand.u32 %s309, 1
          %s1819 = smul.addr %s1818, 64
          %s1820 = scalar_lea.vmem [#allocation13], %s1819
          %1821 = dma.done %s1817, 1024
        $region100: #{tpu_custom_call.1} parent=87 // pred_fallthru
          _
      $region88: #{tpu_custom_call.1} parent=5 // pred_fallthru
        _
    $region6: #{tpu_custom_call.1} parent=1 // loop_footer
      %s33 = sadd.s32 1, %s29
    $region7: #{tpu_custom_call.1} parent=1 // loop_footer_branch
      %28 = sbr.rel target = $region3
    $region8: #{tpu_custom_call.1} parent=1 // loop_exit
      _
    %1822 = vsyncpa [#allocation3], 1
    %s1823 = scalar_lea.sflag [#allocation3], 1
    %1824 = vsyncpa %s1823, 1
    %1825 = vsyncpa [#allocation6], 1
    %1826 = vsyncpa [#allocation9], 1
    %1827 = vsyncpa [#allocation4], 1
    %s1828 = scalar_lea.sflag [#allocation4], 1
    %1829 = vsyncpa %s1828, 1
    %1830 = vsyncpa [#allocation12], 1
    %s1831 = scalar_lea.sflag [#allocation12], 1
    %1832 = vsyncpa %s1831, 1

</llo_original>
